<compile_context>
chip_gen: v7x
topology: tpu7x:2x2x1
jax: 0.10.0
libtpu: 0.0.40
codegen_flags: <defaults>
</compile_context>

<pallas_src>
import functools

import jax
import jax.numpy as jnp
from jax.experimental import pallas as pl
from jax.experimental.pallas import tpu as pltpu


def _round_up(x, m):
    return ((x + m - 1) // m) * m


# --------------------------------------------------------------------------------------
# Fused (im2col-GEMM) * BN-scale + BN-shift + ReLU Pallas kernel
# --------------------------------------------------------------------------------------
def _matmul_bn_act_kernel(a_ref, w_ref, scale_ref, shift_ref, o_ref, acc_ref, *, relu):
    """One (tm, tn) output tile: acc += a @ w; on the last K step apply scale/shift/ReLU."""
    @pl.when(pl.program_id(2) == 0)
    def _init():
        acc_ref[...] = jnp.zeros_like(acc_ref)

    acc_ref[...] += jnp.dot(a_ref[...], w_ref[...],
                            preferred_element_type=jnp.float32)

    @pl.when(pl.program_id(2) == pl.num_programs(2) - 1)
    def _finalize():
        y = acc_ref[...] * scale_ref[...] + shift_ref[...]
        if relu:
            y = jnp.maximum(y, 0.0)
        o_ref[...] = y.astype(o_ref.dtype)


def matmul_bn_act(a, w, scale, shift, *, n_valid, relu, out_dtype):
    """maybe_relu((a @ w) * scale + shift)[:, :n_valid].

    a: (M, K) bf16, w: (K, Np) bf16 (Cout already lane-padded to a multiple of 128),
    scale/shift: (1, Np) f32.  f32 accumulation on the MXU; returns (M, n_valid).
    """
    M, K = a.shape
    Kw, Np = w.shape
    assert K == Kw and Np % 128 == 0

    # 128x128 output tiles match the v5e MXU natively and are safe/fast on v6e/v7x.
    tm = min(128, _round_up(M, 8))
    tn = min(128, Np)
    # Keep the reduction dim un-padded when it fits one block (a trailing block dim equal to
    # the full array dim is allowed); otherwise tile it so the accumulator axis pipelines DMA.
    if K <= 512 or K % 128 != 0:
        tk = K
    else:
        tk = 512 if K % 512 == 0 else 256 if K % 256 == 0 else 128
    nk = K // tk

    Mp = _round_up(M, tm)
    if Mp != M:
        a = jnp.pad(a, ((0, Mp - M), (0, 0)))

    out = pl.pallas_call(
        functools.partial(_matmul_bn_act_kernel, relu=relu),
        out_shape=jax.ShapeDtypeStruct((Mp, Np), out_dtype),
        grid_spec=pltpu.PrefetchScalarGridSpec(
            num_scalar_prefetch=0,
            grid=(Mp // tm, Np // tn, nk),
            in_specs=[
                pl.BlockSpec((tm, tk), lambda i, j, k: (i, k)),
                pl.BlockSpec((tk, tn), lambda i, j, k: (k, j)),
                pl.BlockSpec((1, tn), lambda i, j, k: (0, j)),
                pl.BlockSpec((1, tn), lambda i, j, k: (0, j)),
            ],
            out_specs=pl.BlockSpec((tm, tn), lambda i, j, k: (i, j)),
            scratch_shapes=[pltpu.VMEM((tm, tn), jnp.float32)],
        ),
        compiler_params=pltpu.CompilerParams(
            dimension_semantics=("parallel", "parallel", "arbitrary")),
    )(a, w, scale, shift)
    return out[:M, :n_valid]


# --------------------------------------------------------------------------------------
# Conv3x3 + folded BN + ReLU on NHWC input
# --------------------------------------------------------------------------------------
def conv3x3_bn_relu(x, prep, cout, *, out_dtype):
    """Conv2d(3x3, stride=1, pad=1) + BatchNorm2d (eval, folded) + ReLU.  x: NHWC bf16."""
    N, H, W, Cin = x.shape
    xp = jnp.pad(x, ((0, 0), (1, 1), (1, 1), (0, 0)))
    # TODO(synk): fold this 9-tap im2col into the Pallas kernel (tap-offset reduction axis)
    #             to avoid materialising the 9x-expanded patch matrix in HBM.
    taps = [xp[:, kh:kh + H, kw:kw + W, :] for kh in range(3) for kw in range(3)]
    patches = jnp.concatenate(taps, axis=-1).reshape(N * H * W, 9 * Cin)
    y = matmul_bn_act(patches, prep['wm'], prep['scale'], prep['shift'],
                      n_valid=cout, relu=True, out_dtype=out_dtype)
    return y.reshape(N, H, W, cout)


# --------------------------------------------------------------------------------------
# Parameter preparation (done ONCE, outside the jitted forward)
# --------------------------------------------------------------------------------------
def fold_conv_bn(conv_p, bn_p, eps=1e-5):
    """Fold Conv bias + eval-mode BN into (bf16 (9Cin,Np) weight, f32 scale, f32 shift)."""
    w, b = conv_p['w'], conv_p['b']                  # w: (Cout, Cin, 3, 3) — PyTorch layout
    cout, cin, kh, kw = w.shape
    wm = jnp.transpose(w, (2, 3, 1, 0)).reshape(kh * kw * cin, cout)   # rows = (kh,kw,cin)
    scale = bn_p['gamma'] / jnp.sqrt(bn_p['var'] + eps)
    shift = (b - bn_p['mean']) * scale + bn_p['beta']
    np_ = _round_up(max(cout, 128), 128)             # lane-dense output tiles
    wm = jnp.pad(wm, ((0, 0), (0, np_ - cout))).astype(jnp.bfloat16)
    scale = jnp.pad(scale, (0, np_ - cout)).reshape(1, np_).astype(jnp.float32)
    shift = jnp.pad(shift, (0, np_ - cout)).reshape(1, np_).astype(jnp.float32)
    return {'wm': wm, 'scale': scale, 'shift': shift}


def prepare_unet_block(raw):
    return {'c1': fold_conv_bn(raw['conv1'], raw['bn1']),
            'c2': fold_conv_bn(raw['conv2'], raw['bn2'])}


# --------------------------------------------------------------------------------------
# UnetBlock forward (mirrors the PyTorch module exactly, eval-mode BN)
# --------------------------------------------------------------------------------------
def unet_block_forward(prep, x_nchw, *, out_channel):
    x = jnp.transpose(x_nchw, (0, 2, 3, 1)).astype(jnp.bfloat16)       # NCHW -> NHWC
    y = conv3x3_bn_relu(x, prep['c1'], out_channel, out_dtype=jnp.bfloat16)
    y = conv3x3_bn_relu(y, prep['c2'], out_channel, out_dtype=jnp.float32)
    return jnp.transpose(y, (0, 3, 1, 2))                              # back to NCHW


# --------------------------------------------------------------------------------------
# Deterministic parameter init (shapes from the PyTorch __init__)
# --------------------------------------------------------------------------------------
def init_unet_block_params(key, in_channel, out_channel):
    def init_conv(k, cin, cout):
        kw_, kb_ = jax.random.split(k)
        return {'w': jax.random.normal(kw_, (cout, cin, 3, 3), jnp.float32) / jnp.sqrt(9.0 * cin),
                'b': 0.01 * jax.random.normal(kb_, (cout,), jnp.float32)}

    def init_bn(k, c):
        kg, kb_, km, kv = jax.random.split(k, 4)
        return {'gamma': 1.0 + 0.1 * jax.random.normal(kg, (c,), jnp.float32),
                'beta': 0.1 * jax.random.normal(kb_, (c,), jnp.float32),
                'mean': 0.1 * jax.random.normal(km, (c,), jnp.float32),
                'var': 0.5 + jax.random.uniform(kv, (c,), jnp.float32)}

    k1, k2, k3, k4 = jax.random.split(key, 4)
    return {'conv1': init_conv(k1, in_channel, out_channel), 'bn1': init_bn(k2, out_channel),
            'conv2': init_conv(k3, out_channel, out_channel), 'bn2': init_bn(k4, out_channel)}


# --------------------------------------------------------------------------------------
# Pure-JAX reference (same bf16 operand rounding as the kernel path), for validation
# --------------------------------------------------------------------------------------
def reference_forward(raw, x_nchw, eps=1e-5):
    def conv_bn_relu(x, conv_p, bn_p, keep_bf16):
        xb = x.astype(jnp.bfloat16).astype(jnp.float32)
        w = conv_p['w'].astype(jnp.bfloat16).astype(jnp.float32)
        y = jax.lax.conv_general_dilated(
            xb, jnp.transpose(w, (2, 3, 1, 0)), (1, 1), 'SAME',
            dimension_numbers=('NHWC', 'HWIO', 'NHWC'))
        scale = bn_p['gamma'] / jnp.sqrt(bn_p['var'] + eps)
        shift = (conv_p['b'] - bn_p['mean']) * scale + bn_p['beta']
        y = jnp.maximum(y * scale + shift, 0.0)
        return y.astype(jnp.bfloat16).astype(jnp.float32) if keep_bf16 else y

    x = jnp.transpose(x_nchw, (0, 2, 3, 1))
    y = conv_bn_relu(x, raw['conv1'], raw['bn1'], True)
    y = conv_bn_relu(y, raw['conv2'], raw['bn2'], False)
    return jnp.transpose(y, (0, 3, 1, 2))


if __name__ == "__main__":
    in_channel, out_channel = 4, 32
    key = jax.random.PRNGKey(0)
    k_params, k_x = jax.random.split(key)

    raw = init_unet_block_params(k_params, in_channel, out_channel)
    prep = prepare_unet_block(raw)                         # weight folding: once, outside jit
    x = jax.random.normal(k_x, (2, in_channel, 16, 16), jnp.float32)   # NCHW input

    fwd = jax.jit(functools.partial(unet_block_forward, out_channel=out_channel))
    out = jax.block_until_ready(fwd(prep, x))

    assert out.shape == (2, out_channel, 16, 16), out.shape
    assert bool(jnp.all(jnp.isfinite(out)))

    ref = jax.block_until_ready(reference_forward(raw, x))
    max_err = float(jnp.max(jnp.abs(out - ref)))
    assert max_err < 0.1, f"max abs err vs reference = {max_err}"
    print("KERNEL_OK")
</pallas_src>

<mosaic_0001>
module attributes {stable_mosaic.version = 11 : i64} {
  func.func @_matmul_bn_act_kernel(%arg0: i32, %arg1: i32, %arg2: i32, %arg3: memref<128x36xbf16, #tpu.memory_space<vmem>>, %arg4: memref<36x128xbf16, #tpu.memory_space<vmem>>, %arg5: memref<1x128xf32, #tpu.memory_space<vmem>>, %arg6: memref<1x128xf32, #tpu.memory_space<vmem>>, %arg7: memref<128x128xbf16, #tpu.memory_space<vmem>>, %arg8: memref<128x128xf32, #tpu.memory_space<vmem>>) attributes {dimension_semantics = [#tpu.dimension_semantics<parallel>, #tpu.dimension_semantics<parallel>, #tpu.dimension_semantics<arbitrary>], iteration_bounds = array<i64: 4, 1, 1>, scalar_prefetch = 0 : i64, scratch_operands = 1 : i64, tpu.core_type = #tpu.core_type<tc>, window_params = [{transform_indices = @transform_0, window_bounds = array<i64: 128, 36>}, {transform_indices = @transform_1, window_bounds = array<i64: 36, 128>}, {transform_indices = @transform_2, window_bounds = array<i64: 1, 128>}, {transform_indices = @transform_3, window_bounds = array<i64: 1, 128>}, {transform_indices = @transform_4, window_bounds = array<i64: 128, 128>}]} {
    %c0_i32 = arith.constant 0 : i32
    %0 = arith.cmpi eq, %arg2, %c0_i32 : i32
    %1 = arith.extui %0 : i1 to i32
    %c0_i32_0 = arith.constant 0 : i32
    %2 = arith.cmpi ne, %1, %c0_i32_0 : i32
    scf.if %2 {
      %cst_10 = arith.constant 0.000000e+00 : f32
      %12 = vector.broadcast %cst_10 : f32 to vector<128x128xf32>
      %c0_11 = arith.constant 0 : index
      %c0_12 = arith.constant 0 : index
      %13 = vector.load %arg8[%c0_11, %c0_12] : memref<128x128xf32, #tpu.memory_space<vmem>>, vector<128x128xf32>
      tpu.vector_store %arg8[%c0_11, %c0_12], %12 {strides = array<i32>} : memref<128x128xf32, #tpu.memory_space<vmem>>, vector<128x128xf32>,
    } else {
    }
    %c0 = arith.constant 0 : index
    %c0_1 = arith.constant 0 : index
    %3 = vector.load %arg8[%c0, %c0_1] : memref<128x128xf32, #tpu.memory_space<vmem>>, vector<128x128xf32>
    %c0_2 = arith.constant 0 : index
    %c0_3 = arith.constant 0 : index
    %4 = vector.load %arg3[%c0_2, %c0_3] : memref<128x36xbf16, #tpu.memory_space<vmem>>, vector<128x36xbf16>
    %c0_4 = arith.constant 0 : index
    %c0_5 = arith.constant 0 : index
    %5 = vector.load %arg4[%c0_4, %c0_5] : memref<36x128xbf16, #tpu.memory_space<vmem>>, vector<36x128xbf16>
    %cst = arith.constant dense<0.000000e+00> : vector<128x128xf32>
    %6 = tpu.matmul %4, %5, %cst {dimension_numbers = #tpu.dot_dimension_numbers<[1], [0], [0], [1], [0, 0, 1, 1], [], []>} : vector<128x36xbf16>, vector<36x128xbf16>, vector<128x128xf32> -> vector<128x128xf32>
    %7 = arith.addf %3, %6 : vector<128x128xf32>
    %c0_6 = arith.constant 0 : index
    %c0_7 = arith.constant 0 : index
    %8 = vector.load %arg8[%c0_6, %c0_7] : memref<128x128xf32, #tpu.memory_space<vmem>>, vector<128x128xf32>
    tpu.vector_store %arg8[%c0_6, %c0_7], %7 {strides = array<i32>} : memref<128x128xf32, #tpu.memory_space<vmem>>, vector<128x128xf32>,
    %c0_i32_8 = arith.constant 0 : i32
    %9 = arith.cmpi eq, %arg2, %c0_i32_8 : i32
    %10 = arith.extui %9 : i1 to i32
    %c0_i32_9 = arith.constant 0 : i32
    %11 = arith.cmpi ne, %10, %c0_i32_9 : i32
    scf.if %11 {
      %c0_10 = arith.constant 0 : index
      %c0_11 = arith.constant 0 : index
      %12 = vector.load %arg8[%c0_10, %c0_11] : memref<128x128xf32, #tpu.memory_space<vmem>>, vector<128x128xf32>
      %c0_12 = arith.constant 0 : index
      %c0_13 = arith.constant 0 : index
      %13 = vector.load %arg5[%c0_12, %c0_13] : memref<1x128xf32, #tpu.memory_space<vmem>>, vector<1x128xf32>
      %14 = vector.broadcast %13 : vector<1x128xf32> to vector<128x128xf32>
      %15 = arith.mulf %12, %14 : vector<128x128xf32>
      %c0_14 = arith.constant 0 : index
      %c0_15 = arith.constant 0 : index
      %16 = vector.load %arg6[%c0_14, %c0_15] : memref<1x128xf32, #tpu.memory_space<vmem>>, vector<1x128xf32>
      %17 = vector.broadcast %16 : vector<1x128xf32> to vector<128x128xf32>
      %18 = arith.addf %15, %17 : vector<128x128xf32>
      %cst_16 = arith.constant 0.000000e+00 : f32
      %19 = vector.broadcast %cst_16 : f32 to vector<128x128xf32>
      %20 = arith.maximumf %18, %19 : vector<128x128xf32>
      %21 = arith.truncf %20 : vector<128x128xf32> to vector<128x128xbf16>
      %c0_17 = arith.constant 0 : index
      %c0_18 = arith.constant 0 : index
      %22 = vector.load %arg7[%c0_17, %c0_18] : memref<128x128xbf16, #tpu.memory_space<vmem>>, vector<128x128xbf16>
      tpu.vector_store %arg7[%c0_17, %c0_18], %21 {strides = array<i32>} : memref<128x128xbf16, #tpu.memory_space<vmem>>, vector<128x128xbf16>,
    } else {
    }
    return
  }
  func.func @transform_0(%arg0: i32, %arg1: i32, %arg2: i32) -> (i32, i32) {
    %c0_i32 = arith.constant 0 : i32
    return %arg0, %arg2 : i32, i32
  }
  func.func @transform_1(%arg0: i32, %arg1: i32, %arg2: i32) -> (i32, i32) {
    %c0_i32 = arith.constant 0 : i32
    return %arg2, %arg1 : i32, i32
  }
  func.func @transform_2(%arg0: i32, %arg1: i32, %arg2: i32) -> (i32, i32) {
    %c0_i32 = arith.constant 0 : i32
    %c0_i32_0 = arith.constant 0 : i32
    return %c0_i32, %arg1 : i32, i32
  }
  func.func @transform_3(%arg0: i32, %arg1: i32, %arg2: i32) -> (i32, i32) {
    %c0_i32 = arith.constant 0 : i32
    %c0_i32_0 = arith.constant 0 : i32
    return %c0_i32, %arg1 : i32, i32
  }
  func.func @transform_4(%arg0: i32, %arg1: i32, %arg2: i32) -> (i32, i32) {
    %c0_i32 = arith.constant 0 : i32
    return %arg0, %arg1 : i32, i32
  }
}

module attributes {stable_mosaic.version = 11 : i64} {
  func.func @_matmul_bn_act_kernel(%arg0: i32, %arg1: i32, %arg2: i32, %arg3: memref<128x288xbf16, #tpu.memory_space<vmem>>, %arg4: memref<288x128xbf16, #tpu.memory_space<vmem>>, %arg5: memref<1x128xf32, #tpu.memory_space<vmem>>, %arg6: memref<1x128xf32, #tpu.memory_space<vmem>>, %arg7: memref<128x128xf32, #tpu.memory_space<vmem>>, %arg8: memref<128x128xf32, #tpu.memory_space<vmem>>) attributes {dimension_semantics = [#tpu.dimension_semantics<parallel>, #tpu.dimension_semantics<parallel>, #tpu.dimension_semantics<arbitrary>], iteration_bounds = array<i64: 4, 1, 1>, scalar_prefetch = 0 : i64, scratch_operands = 1 : i64, tpu.core_type = #tpu.core_type<tc>, window_params = [{transform_indices = @transform_0, window_bounds = array<i64: 128, 288>}, {transform_indices = @transform_1, window_bounds = array<i64: 288, 128>}, {transform_indices = @transform_2, window_bounds = array<i64: 1, 128>}, {transform_indices = @transform_3, window_bounds = array<i64: 1, 128>}, {transform_indices = @transform_4, window_bounds = array<i64: 128, 128>}]} {
    %c0_i32 = arith.constant 0 : i32
    %0 = arith.cmpi eq, %arg2, %c0_i32 : i32
    %1 = arith.extui %0 : i1 to i32
    %c0_i32_0 = arith.constant 0 : i32
    %2 = arith.cmpi ne, %1, %c0_i32_0 : i32
    scf.if %2 {
      %cst_10 = arith.constant 0.000000e+00 : f32
      %12 = vector.broadcast %cst_10 : f32 to vector<128x128xf32>
      %c0_11 = arith.constant 0 : index
      %c0_12 = arith.constant 0 : index
      %13 = vector.load %arg8[%c0_11, %c0_12] : memref<128x128xf32, #tpu.memory_space<vmem>>, vector<128x128xf32>
      tpu.vector_store %arg8[%c0_11, %c0_12], %12 {strides = array<i32>} : memref<128x128xf32, #tpu.memory_space<vmem>>, vector<128x128xf32>,
    } else {
    }
    %c0 = arith.constant 0 : index
    %c0_1 = arith.constant 0 : index
    %3 = vector.load %arg8[%c0, %c0_1] : memref<128x128xf32, #tpu.memory_space<vmem>>, vector<128x128xf32>
    %c0_2 = arith.constant 0 : index
    %c0_3 = arith.constant 0 : index
    %4 = vector.load %arg3[%c0_2, %c0_3] : memref<128x288xbf16, #tpu.memory_space<vmem>>, vector<128x288xbf16>
    %c0_4 = arith.constant 0 : index
    %c0_5 = arith.constant 0 : index
    %5 = vector.load %arg4[%c0_4, %c0_5] : memref<288x128xbf16, #tpu.memory_space<vmem>>, vector<288x128xbf16>
    %cst = arith.constant dense<0.000000e+00> : vector<128x128xf32>
    %6 = tpu.matmul %4, %5, %cst {dimension_numbers = #tpu.dot_dimension_numbers<[1], [0], [0], [1], [0, 0, 1, 1], [], []>} : vector<128x288xbf16>, vector<288x128xbf16>, vector<128x128xf32> -> vector<128x128xf32>
    %7 = arith.addf %3, %6 : vector<128x128xf32>
    %c0_6 = arith.constant 0 : index
    %c0_7 = arith.constant 0 : index
    %8 = vector.load %arg8[%c0_6, %c0_7] : memref<128x128xf32, #tpu.memory_space<vmem>>, vector<128x128xf32>
    tpu.vector_store %arg8[%c0_6, %c0_7], %7 {strides = array<i32>} : memref<128x128xf32, #tpu.memory_space<vmem>>, vector<128x128xf32>,
    %c0_i32_8 = arith.constant 0 : i32
    %9 = arith.cmpi eq, %arg2, %c0_i32_8 : i32
    %10 = arith.extui %9 : i1 to i32
    %c0_i32_9 = arith.constant 0 : i32
    %11 = arith.cmpi ne, %10, %c0_i32_9 : i32
    scf.if %11 {
      %c0_10 = arith.constant 0 : index
      %c0_11 = arith.constant 0 : index
      %12 = vector.load %arg8[%c0_10, %c0_11] : memref<128x128xf32, #tpu.memory_space<vmem>>, vector<128x128xf32>
      %c0_12 = arith.constant 0 : index
      %c0_13 = arith.constant 0 : index
      %13 = vector.load %arg5[%c0_12, %c0_13] : memref<1x128xf32, #tpu.memory_space<vmem>>, vector<1x128xf32>
      %14 = vector.broadcast %13 : vector<1x128xf32> to vector<128x128xf32>
      %15 = arith.mulf %12, %14 : vector<128x128xf32>
      %c0_14 = arith.constant 0 : index
      %c0_15 = arith.constant 0 : index
      %16 = vector.load %arg6[%c0_14, %c0_15] : memref<1x128xf32, #tpu.memory_space<vmem>>, vector<1x128xf32>
      %17 = vector.broadcast %16 : vector<1x128xf32> to vector<128x128xf32>
      %18 = arith.addf %15, %17 : vector<128x128xf32>
      %cst_16 = arith.constant 0.000000e+00 : f32
      %19 = vector.broadcast %cst_16 : f32 to vector<128x128xf32>
      %20 = arith.maximumf %18, %19 : vector<128x128xf32>
      %c0_17 = arith.constant 0 : index
      %c0_18 = arith.constant 0 : index
      %21 = vector.load %arg7[%c0_17, %c0_18] : memref<128x128xf32, #tpu.memory_space<vmem>>, vector<128x128xf32>
      tpu.vector_store %arg7[%c0_17, %c0_18], %20 {strides = array<i32>} : memref<128x128xf32, #tpu.memory_space<vmem>>, vector<128x128xf32>,
    } else {
    }
    return
  }
  func.func @transform_0(%arg0: i32, %arg1: i32, %arg2: i32) -> (i32, i32) {
    %c0_i32 = arith.constant 0 : i32
    return %arg0, %arg2 : i32, i32
  }
  func.func @transform_1(%arg0: i32, %arg1: i32, %arg2: i32) -> (i32, i32) {
    %c0_i32 = arith.constant 0 : i32
    return %arg2, %arg1 : i32, i32
  }
  func.func @transform_2(%arg0: i32, %arg1: i32, %arg2: i32) -> (i32, i32) {
    %c0_i32 = arith.constant 0 : i32
    %c0_i32_0 = arith.constant 0 : i32
    return %c0_i32, %arg1 : i32, i32
  }
  func.func @transform_3(%arg0: i32, %arg1: i32, %arg2: i32) -> (i32, i32) {
    %c0_i32 = arith.constant 0 : i32
    %c0_i32_0 = arith.constant 0 : i32
    return %c0_i32, %arg1 : i32, i32
  }
  func.func @transform_4(%arg0: i32, %arg1: i32, %arg2: i32) -> (i32, i32) {
    %c0_i32 = arith.constant 0 : i32
    return %arg0, %arg1 : i32, i32
  }
}

</mosaic_0001>

<llo_original>
// kernel: unet_block_forward.2
$region0: #{unet_block_forward.2}
  #allocation0 [shape = 'u32[]', space=smem, size = 0x4, offset = 0x4, fixed_abs, tag = 'smem constant byte address 0x4 - core index']
  #allocation1 [shape = 'u32[144,128]{1,0:T(1,128)}', space=vmem, size = 0x12000, scoped, tag = 'internal scratch']
  #allocation2 [shape = 'f32[128,128]{1,0:T(8,128)}', space=vmem, size = 0x10000, scoped, tag = 'scratch operand']
  %s0 = inlined_call_operand.vmem [shape: bf16[512,36], index: 0, kind: input, shape index: {}]
  %s1 = inlined_call_operand.vmem [shape: bf16[36,128], index: 1, kind: input, shape index: {}]
  %s2 = inlined_call_operand.vmem [shape: f32[1,128], index: 2, kind: input, shape index: {}]
  %s3 = inlined_call_operand.vmem [shape: f32[1,128], index: 3, kind: input, shape index: {}]
  %s4 = inlined_call_operand.vmem [shape: bf16[512,128], index: 4, kind: output, shape index: {}]
  %s5 = sld [smem:[#allocation0]]
  $region57: #{unet_block_forward.2} parent=0
    _
  %s7 = ssub.s32 1, %s5
  %s8 = scalar_select 0, %s7, %s5
  loop: start=0, step=1, limit=6
  $region2: #{unet_block_forward.2} parent=0 // loop_pre_header
    _
  $region3: #{unet_block_forward.2} parent=0 // loop_header
    %s10 = sphi 0, %s14
    %p11 = scmp.ge.s32.totalorder %s10, 6
    %s17 = sphi 0, %s36
    %s18 = sphi 0, %s32
    %s19 = sphi 0, %s28
    %s20 = sphi 0, %s17
    %s21 = sphi 0, %s18
    %s22 = sphi 0, %s19
    %s23 = sphi 0, %s20
    %s24 = sphi 0, %s21
    %s25 = sphi 0, %s22
    %s41 = sphi 0, %s43
    %s44 = sphi 0, %s41
    %s45 = sphi 0, %s44
    %s61 = sphi 0, %s45
    %s69 = sphi 0, %s71
    %s72 = sphi 0, %s69
    %s73 = sphi 0, %s72
    %s89 = sphi 0, %s73
    %s95 = sphi 0, %s97
    %s98 = sphi 0, %s95
    %s99 = sphi 0, %s98
    %s115 = sphi 0, %s99
    %s121 = sphi 0, %s123
    %s124 = sphi 0, %s121
    %s125 = sphi 0, %s124
    %s141 = sphi 0, %s125
    %s149 = sphi 0, %s151
    %s152 = sphi 0, %s149
    %s153 = sphi 0, %s152
    %s169 = sphi 0, %s153
  $region4: #{unet_block_forward.2} parent=0 // loop_header_branch
    %13 = sbr.rel (%p11) target = $region8
  $region5: #{unet_block_forward.2} parent=0 // loop_body
    %s15 = ssub.s32 %s10, 1
    %s16 = ssub.s32 %s10, 2
    %s26 = sadd.s32 1, %s19
    %p27 = scmp.ge.s32.totalorder %s26, 1
    %s28 = scalar_select %p27, 0, %s26
    %s29 = sadd.s32 1, %s18
    %s30 = scalar_select %p27, %s29, %s18
    %p31 = scmp.ge.s32.totalorder %s30, 1
    %s32 = scalar_select %p31, 0, %s30
    %s33 = sadd.s32 1, %s17
    %s34 = scalar_select %p31, %s33, %s17
    %p35 = scmp.ge.s32.totalorder %s34, 4
    %s36 = scalar_select %p35, 0, %s34
    %s37 = ssub.s32 %s17, %s36
    %s38 = ssub.s32 %s19, %s28
    %s39 = sor.u32 %s37, %s38
    %p40 = scmp.eq.s32.totalorder %s39, 0
    %s42 = sadd.s32 %s41, 1
    %s43 = scalar_select %p40, %s41, %s42
    %p46 = pneg %p40
    %p47 = scmp.eq.s32.totalorder %s10, 3
    %p48 = por %p46, %p47
    %p49 = scmp.ne.s32.totalorder %s41, %s44
    %p50 = scmp.eq.s32.totalorder %s10, 0
    %p51 = por %p49, %p50
    %p52 = scmp.ne.s32.totalorder %s41, %s44
    %p53 = scmp.eq.s32.totalorder %s15, 3
    %p54 = por %p52, %p53
    %p55 = scmp.ne.s32.totalorder %s44, %s45
    %p56 = scmp.eq.s32.totalorder %s15, 0
    %p57 = por %p55, %p56
    %p58 = scmp.ne.s32.totalorder %s44, %s45
    %p59 = scmp.eq.s32.totalorder %s16, 3
    %p60 = por %p58, %p59
    %p62 = scmp.ne.s32.totalorder %s45, %s61
    %p63 = scmp.eq.s32.totalorder %s16, 0
    %p64 = por %p62, %p63
    %s65 = ssub.s32 %s19, %s28
    %s66 = ssub.s32 %s18, %s32
    %s67 = sor.u32 %s65, %s66
    %p68 = scmp.eq.s32.totalorder %s67, 0
    %s70 = sadd.s32 %s69, 1
    %s71 = scalar_select %p68, %s69, %s70
    %p74 = pneg %p68
    %p75 = scmp.eq.s32.totalorder %s10, 3
    %p76 = por %p74, %p75
    %p77 = scmp.ne.s32.totalorder %s69, %s72
    %p78 = scmp.eq.s32.totalorder %s10, 0
    %p79 = por %p77, %p78
    %p80 = scmp.ne.s32.totalorder %s69, %s72
    %p81 = scmp.eq.s32.totalorder %s15, 3
    %p82 = por %p80, %p81
    %p83 = scmp.ne.s32.totalorder %s72, %s73
    %p84 = scmp.eq.s32.totalorder %s15, 0
    %p85 = por %p83, %p84
    %p86 = scmp.ne.s32.totalorder %s72, %s73
    %p87 = scmp.eq.s32.totalorder %s16, 3
    %p88 = por %p86, %p87
    %p90 = scmp.ne.s32.totalorder %s73, %s89
    %p91 = scmp.eq.s32.totalorder %s16, 0
    %p92 = por %p90, %p91
    %s93 = ssub.s32 %s18, %s32
    %p94 = scmp.eq.s32.totalorder %s93, 0
    %s96 = sadd.s32 %s95, 1
    %s97 = scalar_select %p94, %s95, %s96
    %p100 = pneg %p94
    %p101 = scmp.eq.s32.totalorder %s10, 3
    %p102 = por %p100, %p101
    %p103 = scmp.ne.s32.totalorder %s95, %s98
    %p104 = scmp.eq.s32.totalorder %s10, 0
    %p105 = por %p103, %p104
    %p106 = scmp.ne.s32.totalorder %s95, %s98
    %p107 = scmp.eq.s32.totalorder %s15, 3
    %p108 = por %p106, %p107
    %p109 = scmp.ne.s32.totalorder %s98, %s99
    %p110 = scmp.eq.s32.totalorder %s15, 0
    %p111 = por %p109, %p110
    %p112 = scmp.ne.s32.totalorder %s98, %s99
    %p113 = scmp.eq.s32.totalorder %s16, 3
    %p114 = por %p112, %p113
    %p116 = scmp.ne.s32.totalorder %s99, %s115
    %p117 = scmp.eq.s32.totalorder %s16, 0
    %p118 = por %p116, %p117
    %s119 = ssub.s32 %s18, %s32
    %p120 = scmp.eq.s32.totalorder %s119, 0
    %s122 = sadd.s32 %s121, 1
    %s123 = scalar_select %p120, %s121, %s122
    %p126 = pneg %p120
    %p127 = scmp.eq.s32.totalorder %s10, 3
    %p128 = por %p126, %p127
    %p129 = scmp.ne.s32.totalorder %s121, %s124
    %p130 = scmp.eq.s32.totalorder %s10, 0
    %p131 = por %p129, %p130
    %p132 = scmp.ne.s32.totalorder %s121, %s124
    %p133 = scmp.eq.s32.totalorder %s15, 3
    %p134 = por %p132, %p133
    %p135 = scmp.ne.s32.totalorder %s124, %s125
    %p136 = scmp.eq.s32.totalorder %s15, 0
    %p137 = por %p135, %p136
    %p138 = scmp.ne.s32.totalorder %s124, %s125
    %p139 = scmp.eq.s32.totalorder %s16, 3
    %p140 = por %p138, %p139
    %p142 = scmp.ne.s32.totalorder %s125, %s141
    %p143 = scmp.eq.s32.totalorder %s16, 0
    %p144 = por %p142, %p143
    %s145 = ssub.s32 %s17, %s36
    %s146 = ssub.s32 %s18, %s32
    %s147 = sor.u32 %s145, %s146
    %p148 = scmp.eq.s32.totalorder %s147, 0
    %s150 = sadd.s32 %s149, 1
    %s151 = scalar_select %p148, %s149, %s150
    %p154 = pneg %p148
    %p155 = scmp.eq.s32.totalorder %s10, 3
    %p156 = por %p154, %p155
    %p157 = scmp.ne.s32.totalorder %s149, %s152
    %p158 = scmp.eq.s32.totalorder %s10, 0
    %p159 = por %p157, %p158
    %p160 = scmp.ne.s32.totalorder %s149, %s152
    %p161 = scmp.eq.s32.totalorder %s15, 3
    %p162 = por %p160, %p161
    %p163 = scmp.ne.s32.totalorder %s152, %s153
    %p164 = scmp.eq.s32.totalorder %s15, 0
    %p165 = por %p163, %p164
    %p166 = scmp.ne.s32.totalorder %s152, %s153
    %p167 = scmp.eq.s32.totalorder %s16, 3
    %p168 = por %p166, %p167
    %p170 = scmp.ne.s32.totalorder %s153, %s169
    %p171 = scmp.eq.s32.totalorder %s16, 0
    %p172 = por %p170, %p171
    %p173 = scmp.le.s32.totalorder 1, %s10
    %p174 = scmp.lt.s32.totalorder %s10, 5
    %p175 = pnand %p173, %p174
    %p176 = pneg %p175
    // Predicated region
    $region9: #{unet_block_forward.2} parent=5 // pred_check
      _
    $region10: #{unet_block_forward.2} parent=5 // pred_check_branch
      %178 = sbr.rel (%p175) target = $region12
    $region11: #{unet_block_forward.2} parent=5 // pred_region
      %s179 = ssub.s32 %s10, 1
      // Predicated region
      $region13: #{unet_block_forward.2} parent=11 // pred_check
        %p180 = pneg %p85
      $region14: #{unet_block_forward.2} parent=11 // pred_check_branch
        %182 = sbr.rel (%p180) target = $region16
      $region15: #{unet_block_forward.2} parent=11 // pred_region
        %s183 = smul.u32 5, %s22
        %p184 = scmp.lt.s32.totalorder %s183, 4
        %s185 = scalar_select %p184, %s183, 4
        %p186 = scmp.lt.s32.totalorder %s21, 0
        %s187 = scalar_select %p186, %s21, 0
        %s188 = sadd.s32 %s187, %s185
        %s189 = smul.addr %s188, 4
        %s190 = scalar_lea.vmem %s1, %s189
        %s191 = smul.u32 5, %s22
      $region16: #{unet_block_forward.2} parent=11 // pred_fallthru
        _
      // Predicated region
      $region17: #{unet_block_forward.2} parent=11 // pred_check
        %p192 = pneg %p111
      $region18: #{unet_block_forward.2} parent=11 // pred_check_branch
        %194 = sbr.rel (%p192) target = $region20
      $region19: #{unet_block_forward.2} parent=11 // pred_region
        %p195 = scmp.lt.s32.totalorder %s21, 0
        %s196 = scalar_select %p195, %s21, 0
        %s197 = scalar_lea.vmem %s2, %s196
      $region20: #{unet_block_forward.2} parent=11 // pred_fallthru
        _
      // Predicated region
      $region21: #{unet_block_forward.2} parent=11 // pred_check
        %p198 = pneg %p137
      $region22: #{unet_block_forward.2} parent=11 // pred_check_branch
        %200 = sbr.rel (%p198) target = $region24
      $region23: #{unet_block_forward.2} parent=11 // pred_region
        %p201 = scmp.lt.s32.totalorder %s21, 0
        %s202 = scalar_select %p201, %s21, 0
        %s203 = scalar_lea.vmem %s3, %s202
      $region24: #{unet_block_forward.2} parent=11 // pred_fallthru
        _
    $region12: #{unet_block_forward.2} parent=5 // pred_fallthru
      _
    %p204 = scmp.lt.s32.totalorder %s10, 4
    // Predicated region
    $region25: #{unet_block_forward.2} parent=5 // pred_check
      %p205 = pneg %p204
    $region26: #{unet_block_forward.2} parent=5 // pred_check_branch
      %207 = sbr.rel (%p205) target = $region28
    $region27: #{unet_block_forward.2} parent=5 // pred_region
      // Predicated region
      $region29: #{unet_block_forward.2} parent=27 // pred_check
        %p208 = pneg %p51
      $region30: #{unet_block_forward.2} parent=27 // pred_check_branch
        %210 = sbr.rel (%p208) target = $region32
      $region31: #{unet_block_forward.2} parent=27 // pred_region
        %s211 = smul.u32 16, %s17
        %p212 = scmp.lt.s32.totalorder %s211, 63
        %s213 = scalar_select %p212, %s211, 63
        %p214 = scmp.lt.s32.totalorder %s19, 0
        %s215 = scalar_select %p214, %s19, 0
        %s216 = sadd.s32 %s215, %s213
        %s217 = smul.addr %s216, 4
        %s218 = scalar_lea.vmem %s0, %s217
        %s219 = smul.u32 16, %s17
      $region32: #{unet_block_forward.2} parent=27 // pred_fallthru
        _
    $region28: #{unet_block_forward.2} parent=5 // pred_fallthru
      _
    %p220 = scmp.le.s32.totalorder 1, %s10
    %p221 = scmp.lt.s32.totalorder %s10, 5
    %p222 = pnand %p220, %p221
    %p223 = pneg %p222
    // Predicated region
    $region33: #{unet_block_forward.2} parent=5 // pred_check
      _
    $region34: #{unet_block_forward.2} parent=5 // pred_check_branch
      %225 = sbr.rel (%p222) target = $region36
    $region35: #{unet_block_forward.2} parent=5 // pred_region
      %s226 = ssub.s32 %s10, 1
      %s227 = smul.u32 16, %s20
      %p228 = scmp.lt.s32.totalorder %s227, 63
      %s229 = scalar_select %p228, %s227, 63
      %p230 = scmp.lt.s32.totalorder %s22, 0
      %s231 = scalar_select %p230, %s22, 0
      %s232 = sadd.s32 %s231, %s229
      %s233 = smul.addr %s232, 4
      %s234 = scalar_lea.vmem %s0, %s233
      %p235 = pneg %p57
      %p236 = pneg %p54
      %s237 = smul.u32 5, %s22
      %p238 = scmp.lt.s32.totalorder %s237, 4
      %s239 = scalar_select %p238, %s237, 4
      %p240 = scmp.lt.s32.totalorder %s21, 0
      %s241 = scalar_select %p240, %s21, 0
      %s242 = sadd.s32 %s241, %s239
      %s243 = smul.addr %s242, 4
      %s244 = scalar_lea.vmem %s1, %s243
      %p245 = pneg %p85
      %p246 = pneg %p82
      %p247 = scmp.lt.s32.totalorder %s21, 0
      %s248 = scalar_select %p247, %s21, 0
      %s249 = scalar_lea.vmem %s2, %s248
      %p250 = pneg %p111
      %p251 = pneg %p108
      %p252 = scmp.lt.s32.totalorder %s21, 0
      %s253 = scalar_select %p252, %s21, 0
      %s254 = scalar_lea.vmem %s3, %s253
      %p255 = pneg %p137
      %p256 = pneg %p134
      %p257 = pneg %p165
      %p258 = pneg %p162
      %s259 = smul.u32 16, %s20
      %p260 = scmp.lt.s32.totalorder %s259, 63
      %s261 = scalar_select %p260, %s259, 63
      %p262 = scmp.lt.s32.totalorder %s21, 0
      %s263 = scalar_select %p262, %s21, 0
      %s264 = sadd.s32 %s263, %s261
      %s265 = smul.addr %s264, 4
      %s266 = scalar_lea.vmem %s4, %s265
      %s267 = smul.u32 16, %s20
      %p268 = scmp.lt.s32.totalorder %s267, 63
      %s269 = scalar_select %p268, %s267, 63
      %p270 = scmp.lt.s32.totalorder %s22, 0
      %s271 = scalar_select %p270, %s22, 0
      %s272 = sadd.s32 %s271, %s269
      %s273 = smul.addr %s272, 4
      %s274 = scalar_lea.vmem %s0, %s273
      %s275 = smul.u32 16, %s20
      %s276 = smul.u32 5, %s22
      %p277 = scmp.lt.s32.totalorder %s276, 4
      %s278 = scalar_select %p277, %s276, 4
      %p279 = scmp.lt.s32.totalorder %s21, 0
      %s280 = scalar_select %p279, %s21, 0
      %s281 = sadd.s32 %s280, %s278
      %s282 = smul.addr %s281, 4
      %s283 = scalar_lea.vmem %s1, %s282
      %s284 = smul.u32 5, %s22
      %p285 = scmp.lt.s32.totalorder %s21, 0
      %s286 = scalar_select %p285, %s21, 0
      %s287 = scalar_lea.vmem %s2, %s286
      %p288 = scmp.lt.s32.totalorder %s21, 0
      %s289 = scalar_select %p288, %s21, 0
      %s290 = scalar_lea.vmem %s3, %s289
      %s291 = smul.u32 16, %s20
      %p292 = scmp.lt.s32.totalorder %s291, 63
      %s293 = scalar_select %p292, %s291, 63
      %p294 = scmp.lt.s32.totalorder %s21, 0
      %s295 = scalar_select %p294, %s21, 0
      %s296 = sadd.s32 %s295, %s293
      %s297 = smul.addr %s296, 4
      %s298 = scalar_lea.vmem %s4, %s297
      %s299 = smul.u32 16, %s20
      %p301 = scmp.eq.s32.totalorder %s22, 0
      // Predicated region
      $region37: #{unet_block_forward.2} parent=35 // pred_check
        %p302 = pneg %p301
      $region38: #{unet_block_forward.2} parent=35 // pred_check_branch
        %304 = sbr.rel (%p302) target = $region40
      $region39: #{unet_block_forward.2} parent=35 // pred_region
        %305 = vst [vmem:[#allocation2] sm:$0xff] 0.0
        %306 = vst [vmem:[#allocation2 + $0x8] sm:$0xff] 0.0
        %307 = vst [vmem:[#allocation2 + $0x10] sm:$0xff] 0.0
        %308 = vst [vmem:[#allocation2 + $0x18] sm:$0xff] 0.0
        %309 = vst [vmem:[#allocation2 + $0x20] sm:$0xff] 0.0
        %310 = vst [vmem:[#allocation2 + $0x28] sm:$0xff] 0.0
        %311 = vst [vmem:[#allocation2 + $0x30] sm:$0xff] 0.0
        %312 = vst [vmem:[#allocation2 + $0x38] sm:$0xff] 0.0
        %313 = vst [vmem:[#allocation2 + $0x40] sm:$0xff] 0.0
        %314 = vst [vmem:[#allocation2 + $0x48] sm:$0xff] 0.0
        %315 = vst [vmem:[#allocation2 + $0x50] sm:$0xff] 0.0
        %316 = vst [vmem:[#allocation2 + $0x58] sm:$0xff] 0.0
        %317 = vst [vmem:[#allocation2 + $0x60] sm:$0xff] 0.0
        %318 = vst [vmem:[#allocation2 + $0x68] sm:$0xff] 0.0
        %319 = vst [vmem:[#allocation2 + $0x70] sm:$0xff] 0.0
        %320 = vst [vmem:[#allocation2 + $0x78] sm:$0xff] 0.0
      $region40: #{unet_block_forward.2} parent=35 // pred_fallthru
        _
      %v321 = vld [vmem:[#allocation2] sm:$0xff]
      %v322 = vld [vmem:[#allocation2 + $0x8] sm:$0xff]
      %v323 = vld [vmem:[#allocation2 + $0x10] sm:$0xff]
      %v324 = vld [vmem:[#allocation2 + $0x18] sm:$0xff]
      %v325 = vld [vmem:[#allocation2 + $0x20] sm:$0xff]
      %v326 = vld [vmem:[#allocation2 + $0x28] sm:$0xff]
      %v327 = vld [vmem:[#allocation2 + $0x30] sm:$0xff]
      %v328 = vld [vmem:[#allocation2 + $0x38] sm:$0xff]
      %v329 = vld [vmem:[#allocation2 + $0x40] sm:$0xff]
      %v330 = vld [vmem:[#allocation2 + $0x48] sm:$0xff]
      %v331 = vld [vmem:[#allocation2 + $0x50] sm:$0xff]
      %v332 = vld [vmem:[#allocation2 + $0x58] sm:$0xff]
      %v333 = vld [vmem:[#allocation2 + $0x60] sm:$0xff]
      %v334 = vld [vmem:[#allocation2 + $0x68] sm:$0xff]
      %v335 = vld [vmem:[#allocation2 + $0x70] sm:$0xff]
      %v336 = vld [vmem:[#allocation2 + $0x78] sm:$0xff]
      %v337 = vld [vmem:[%s274] sm:$0xf]
      %v338 = vld [vmem:[%s274 + $0x4] sm:$0xf]
      %v339 = vld [vmem:[%s274 + $0x8] sm:$0xf]
      %v340 = vld [vmem:[%s274 + $0xc] sm:$0xf]
      %v341 = vld [vmem:[%s274 + $0x10] sm:$0xf]
      %v342 = vld [vmem:[%s274 + $0x14] sm:$0xf]
      %v343 = vld [vmem:[%s274 + $0x18] sm:$0xf]
      %v344 = vld [vmem:[%s274 + $0x1c] sm:$0xf]
      %v345 = vld [vmem:[%s274 + $0x20] sm:$0xf]
      %v346 = vld [vmem:[%s274 + $0x24] sm:$0xf]
      %v347 = vld [vmem:[%s274 + $0x28] sm:$0xf]
      %v348 = vld [vmem:[%s274 + $0x2c] sm:$0xf]
      %v349 = vld [vmem:[%s274 + $0x30] sm:$0xf]
      %v350 = vld [vmem:[%s274 + $0x34] sm:$0xf]
      %v351 = vld [vmem:[%s274 + $0x38] sm:$0xf]
      %v352 = vld [vmem:[%s274 + $0x3c] sm:$0xf]
      %v353 = vld [vmem:[%s283] sm:$0xf]
      %v354 = vld [vmem:[%s283 + $0x4] sm:$0xf]
      %v355 = vld [vmem:[%s283 + $0x8] sm:$0xf]
      %v356 = vld [vmem:[%s283 + $0xc] sm:$0xf]
      %v357 = vld [vmem:[%s283 + $0x10] sm:$0x3]
      %v374 = vunpack.c.l.b16 %v337
      %v375 = vunpack.c.l.b16 %v338
      %v376 = vunpack.c.l.b16 %v339
      %v377 = vunpack.c.l.b16 %v340
      %v378 = vunpack.c.l.b16 %v341
      %v379 = vunpack.c.l.b16 %v342
      %v380 = vunpack.c.l.b16 %v343
      %v381 = vunpack.c.l.b16 %v344
      %v382 = vunpack.c.l.b16 %v345
      %v383 = vunpack.c.l.b16 %v346
      %v384 = vunpack.c.l.b16 %v347
      %v385 = vunpack.c.l.b16 %v348
      %v386 = vunpack.c.l.b16 %v349
      %v387 = vunpack.c.l.b16 %v350
      %v388 = vunpack.c.l.b16 %v351
      %v389 = vunpack.c.l.b16 %v352
      %v390 = vpack.c.b16 %v375, %v374
      %v391 = vpack.c.b16 %v377, %v376
      %v392 = vpack.c.b16 %v379, %v378
      %v393 = vpack.c.b16 %v381, %v380
      %v394 = vpack.c.b16 %v383, %v382
      %v395 = vpack.c.b16 %v385, %v384
      %v396 = vpack.c.b16 %v387, %v386
      %v397 = vpack.c.b16 %v389, %v388
      %v403 = vunpack.c.l.b16 %v353
      %v404 = vunpack.c.l.b16 %v354
      %v405 = vunpack.c.l.b16 %v355
      %v406 = vunpack.c.l.b16 %v356
      %v407 = vunpack.c.l.b16 %v357
      %v408 = vpack.c.b16 %v404, %v403
      %v409 = vpack.c.b16 %v406, %v405
      %v410 = vpack.c.b16 %v407, %v407
      %vm413 = vcmask 293888
      %v415 = vsel %vm413, %v390, 0
      %v418 = vsel %vm413, %v391, 0
      %v421 = vsel %vm413, %v392, 0
      %v424 = vsel %vm413, %v393, 0
      %v427 = vsel %vm413, %v394, 0
      %v430 = vsel %vm413, %v395, 0
      %v433 = vsel %vm413, %v396, 0
      %v436 = vsel %vm413, %v397, 0
      %vm438 = vcmask 1041408
      %v440 = vsel %vm438, %v410, 0
      %442 = vmatprep.subr.bf16.mxu0 0
      %443 = vmatpush1.bf16.msra.mxu0 %v408
      %444 = vmatprep.subr.bf16.mxu0 0
      %445 = vmatpush1.bf16.msra.mxu0 %v409
      %446 = vmatprep.subr.bf16.mxu0 0
      %447 = vmatpush1.bf16.msra.mxu0 %v440
      %448 = vmatprep.subr.bf16.mxu0 0
      %449 = vmatpush1.bf16.msra.mxu0 0
      %450 = vmatprep.subr.bf16.mxu0 0
      %451 = vmatpush1.bf16.msra.mxu0 0
      %452 = vmatprep.subr.bf16.mxu0 0
      %453 = vmatpush1.bf16.msra.mxu0 0
      %454 = vmatprep.subr.bf16.mxu0 0
      %455 = vmatpush1.bf16.msra.mxu0 0
      %456 = vmatprep.subr.bf16.mxu0 0
      %457 = vmatpush1.bf16.msra.mxu0 0
      %458 = vmatprep.subr.bf16.mxu0 0
      %459 = vmatpush1.bf16.msra.mxu0 0
      %460 = vmatprep.subr.bf16.mxu0 0
      %461 = vmatpush1.bf16.msra.mxu0 0
      %462 = vmatprep.subr.bf16.mxu0 0
      %463 = vmatpush1.bf16.msra.mxu0 0
      %464 = vmatprep.subr.bf16.mxu0 0
      %465 = vmatpush1.bf16.msra.mxu0 0
      %466 = vmatprep.subr.bf16.mxu0 0
      %467 = vmatpush1.bf16.msra.mxu0 0
      %468 = vmatprep.subr.bf16.mxu0 0
      %469 = vmatpush1.bf16.msra.mxu0 0
      %470 = vmatprep.subr.bf16.mxu0 0
      %471 = vmatpush1.bf16.msra.mxu0 0
      %472 = vmatprep.subr.bf16.mxu0 0
      %473 = vmatpush1.bf16.msra.mxu0 0
      %474 = vmatprep.mubr.bf16.mxu0 0
      %475 = vmatmul.mubr.bf16.gmra.mrb[0].mxu0 %v415
      %v476 = vpop.f32.mrb[0].mxu0
      %v477 = vadd.f32 0.0, %v476
      %v478 = vpop.f32.mrb[0].mxu0
      %v479 = vpop.f32.mrb[0].mxu0
      %v480 = vadd.f32 0.0, %v479
      %v481 = vpop.f32.mrb[0].mxu0
      %482 = vmatprep.mubr.bf16.mxu0 0
      %483 = vmatmul.mubr.bf16.gmra.mrb[0].mxu0 %v418
      %v484 = vpop.f32.mrb[0].mxu0
      %v485 = vadd.f32 0.0, %v484
      %v486 = vpop.f32.mrb[0].mxu0
      %v487 = vpop.f32.mrb[0].mxu0
      %v488 = vadd.f32 0.0, %v487
      %v489 = vpop.f32.mrb[0].mxu0
      %490 = vmatprep.mubr.bf16.mxu0 0
      %491 = vmatmul.mubr.bf16.gmra.mrb[0].mxu0 %v421
      %v492 = vpop.f32.mrb[0].mxu0
      %v493 = vadd.f32 0.0, %v492
      %v494 = vpop.f32.mrb[0].mxu0
      %v495 = vpop.f32.mrb[0].mxu0
      %v496 = vadd.f32 0.0, %v495
      %v497 = vpop.f32.mrb[0].mxu0
      %498 = vmatprep.mubr.bf16.mxu0 0
      %499 = vmatmul.mubr.bf16.gmra.mrb[0].mxu0 %v424
      %v500 = vpop.f32.mrb[0].mxu0
      %v501 = vadd.f32 0.0, %v500
      %v502 = vpop.f32.mrb[0].mxu0
      %v503 = vpop.f32.mrb[0].mxu0
      %v504 = vadd.f32 0.0, %v503
      %v505 = vpop.f32.mrb[0].mxu0
      %506 = vmatprep.mubr.bf16.mxu0 0
      %507 = vmatmul.mubr.bf16.gmra.mrb[0].mxu0 %v427
      %v508 = vpop.f32.mrb[0].mxu0
      %v509 = vadd.f32 0.0, %v508
      %v510 = vpop.f32.mrb[0].mxu0
      %v511 = vpop.f32.mrb[0].mxu0
      %v512 = vadd.f32 0.0, %v511
      %v513 = vpop.f32.mrb[0].mxu0
      %514 = vmatprep.mubr.bf16.mxu0 0
      %515 = vmatmul.mubr.bf16.gmra.mrb[0].mxu0 %v430
      %v516 = vpop.f32.mrb[0].mxu0
      %v517 = vadd.f32 0.0, %v516
      %v518 = vpop.f32.mrb[0].mxu0
      %v519 = vpop.f32.mrb[0].mxu0
      %v520 = vadd.f32 0.0, %v519
      %v521 = vpop.f32.mrb[0].mxu0
      %522 = vmatprep.mubr.bf16.mxu0 0
      %523 = vmatmul.mubr.bf16.gmra.mrb[0].mxu0 %v433
      %v524 = vpop.f32.mrb[0].mxu0
      %v525 = vadd.f32 0.0, %v524
      %v526 = vpop.f32.mrb[0].mxu0
      %v527 = vpop.f32.mrb[0].mxu0
      %v528 = vadd.f32 0.0, %v527
      %v529 = vpop.f32.mrb[0].mxu0
      %530 = vmatprep.mubr.bf16.mxu0 0
      %531 = vmatmul.mubr.bf16.gmra.mrb[0].mxu0 %v436
      %v532 = vpop.f32.mrb[0].mxu0
      %v533 = vadd.f32 0.0, %v532
      %v534 = vpop.f32.mrb[0].mxu0
      %v535 = vpop.f32.mrb[0].mxu0
      %v536 = vadd.f32 0.0, %v535
      %v537 = vpop.f32.mrb[0].mxu0
      %538 = vdwg.mxu0
      %v539 = vadd.f32 %v321, %v477
      %v540 = vadd.f32 %v322, %v480
      %v541 = vadd.f32 %v323, %v485
      %v542 = vadd.f32 %v324, %v488
      %v543 = vadd.f32 %v325, %v493
      %v544 = vadd.f32 %v326, %v496
      %v545 = vadd.f32 %v327, %v501
      %v546 = vadd.f32 %v328, %v504
      %v547 = vadd.f32 %v329, %v509
      %v548 = vadd.f32 %v330, %v512
      %v549 = vadd.f32 %v331, %v517
      %v550 = vadd.f32 %v332, %v520
      %v551 = vadd.f32 %v333, %v525
      %v552 = vadd.f32 %v334, %v528
      %v553 = vadd.f32 %v335, %v533
      %v554 = vadd.f32 %v336, %v536
      %555 = vst [vmem:[#allocation2] sm:$0xff] %v539
      %556 = vst [vmem:[#allocation2 + $0x8] sm:$0xff] %v540
      %557 = vst [vmem:[#allocation2 + $0x10] sm:$0xff] %v541
      %558 = vst [vmem:[#allocation2 + $0x18] sm:$0xff] %v542
      %559 = vst [vmem:[#allocation2 + $0x20] sm:$0xff] %v543
      %560 = vst [vmem:[#allocation2 + $0x28] sm:$0xff] %v544
      %561 = vst [vmem:[#allocation2 + $0x30] sm:$0xff] %v545
      %562 = vst [vmem:[#allocation2 + $0x38] sm:$0xff] %v546
      %563 = vst [vmem:[#allocation2 + $0x40] sm:$0xff] %v547
      %564 = vst [vmem:[#allocation2 + $0x48] sm:$0xff] %v548
      %565 = vst [vmem:[#allocation2 + $0x50] sm:$0xff] %v549
      %566 = vst [vmem:[#allocation2 + $0x58] sm:$0xff] %v550
      %567 = vst [vmem:[#allocation2 + $0x60] sm:$0xff] %v551
      %568 = vst [vmem:[#allocation2 + $0x68] sm:$0xff] %v552
      %569 = vst [vmem:[#allocation2 + $0x70] sm:$0xff] %v553
      %570 = vst [vmem:[#allocation2 + $0x78] sm:$0xff] %v554
      // Predicated region
      $region41: #{unet_block_forward.2} parent=35 // pred_check
        %p571 = pneg %p301
      $region42: #{unet_block_forward.2} parent=35 // pred_check_branch
        %573 = sbr.rel (%p571) target = $region44
      $region43: #{unet_block_forward.2} parent=35 // pred_region
        %v574 = vld [vmem:[#allocation2] sm:$0xff]
        %v575 = vld [vmem:[#allocation2 + $0x8] sm:$0xff]
        %v576 = vld [vmem:[#allocation2 + $0x10] sm:$0xff]
        %v577 = vld [vmem:[#allocation2 + $0x18] sm:$0xff]
        %v578 = vld [vmem:[#allocation2 + $0x20] sm:$0xff]
        %v579 = vld [vmem:[#allocation2 + $0x28] sm:$0xff]
        %v580 = vld [vmem:[#allocation2 + $0x30] sm:$0xff]
        %v581 = vld [vmem:[#allocation2 + $0x38] sm:$0xff]
        %v582 = vld [vmem:[#allocation2 + $0x40] sm:$0xff]
        %v583 = vld [vmem:[#allocation2 + $0x48] sm:$0xff]
        %v584 = vld [vmem:[#allocation2 + $0x50] sm:$0xff]
        %v585 = vld [vmem:[#allocation2 + $0x58] sm:$0xff]
        %v586 = vld [vmem:[#allocation2 + $0x60] sm:$0xff]
        %v587 = vld [vmem:[#allocation2 + $0x68] sm:$0xff]
        %v588 = vld [vmem:[#allocation2 + $0x70] sm:$0xff]
        %v589 = vld [vmem:[#allocation2 + $0x78] sm:$0xff]
        %v590 = vld [vmem:[%s287] sm:$0x1]
        %v592 = vlaneseq
        %v593 = vshrl.u32 %v592, 7
        %v594 = vsub.s32 0, %v593
        %v595 = vrot.slane %v590, %v594
        %v597 = vmul.f32 %v574, %v595
        %v598 = vmul.f32 %v575, %v595
        %v599 = vmul.f32 %v576, %v595
        %v600 = vmul.f32 %v577, %v595
        %v601 = vmul.f32 %v578, %v595
        %v602 = vmul.f32 %v579, %v595
        %v603 = vmul.f32 %v580, %v595
        %v604 = vmul.f32 %v581, %v595
        %v605 = vmul.f32 %v582, %v595
        %v606 = vmul.f32 %v583, %v595
        %v607 = vmul.f32 %v584, %v595
        %v608 = vmul.f32 %v585, %v595
        %v609 = vmul.f32 %v586, %v595
        %v610 = vmul.f32 %v587, %v595
        %v611 = vmul.f32 %v588, %v595
        %v612 = vmul.f32 %v589, %v595
        %v613 = vld [vmem:[%s290] sm:$0x1]
        %v615 = vlaneseq
        %v616 = vshrl.u32 %v615, 7
        %v617 = vsub.s32 0, %v616
        %v618 = vrot.slane %v613, %v617
        %v620 = vadd.f32 %v597, %v618
        %v621 = vadd.f32 %v598, %v618
        %v622 = vadd.f32 %v599, %v618
        %v623 = vadd.f32 %v600, %v618
        %v624 = vadd.f32 %v601, %v618
        %v625 = vadd.f32 %v602, %v618
        %v626 = vadd.f32 %v603, %v618
        %v627 = vadd.f32 %v604, %v618
        %v628 = vadd.f32 %v605, %v618
        %v629 = vadd.f32 %v606, %v618
        %v630 = vadd.f32 %v607, %v618
        %v631 = vadd.f32 %v608, %v618
        %v632 = vadd.f32 %v609, %v618
        %v633 = vadd.f32 %v610, %v618
        %v634 = vadd.f32 %v611, %v618
        %v635 = vadd.f32 %v612, %v618
        %v636 = vmax.f32 %v620, 0.0
        %v637 = vmax.f32 %v621, 0.0
        %v638 = vmax.f32 %v622, 0.0
        %v639 = vmax.f32 %v623, 0.0
        %v640 = vmax.f32 %v624, 0.0
        %v641 = vmax.f32 %v625, 0.0
        %v642 = vmax.f32 %v626, 0.0
        %v643 = vmax.f32 %v627, 0.0
        %v644 = vmax.f32 %v628, 0.0
        %v645 = vmax.f32 %v629, 0.0
        %v646 = vmax.f32 %v630, 0.0
        %v647 = vmax.f32 %v631, 0.0
        %v648 = vmax.f32 %v632, 0.0
        %v649 = vmax.f32 %v633, 0.0
        %v650 = vmax.f32 %v634, 0.0
        %v651 = vmax.f32 %v635, 0.0
        %v652 = vpack.c.bf16 %v637, %v636
        %v653 = vpack.c.bf16 %v639, %v638
        %v654 = vpack.c.bf16 %v641, %v640
        %v655 = vpack.c.bf16 %v643, %v642
        %v656 = vpack.c.bf16 %v645, %v644
        %v657 = vpack.c.bf16 %v647, %v646
        %v658 = vpack.c.bf16 %v649, %v648
        %v659 = vpack.c.bf16 %v651, %v650
        %v668 = vunpack.c.l.b16 %v652
        %v669 = vunpack.c.h.b16 %v652
        %v670 = vunpack.c.l.b16 %v653
        %v671 = vunpack.c.h.b16 %v653
        %v672 = vunpack.c.l.b16 %v654
        %v673 = vunpack.c.h.b16 %v654
        %v674 = vunpack.c.l.b16 %v655
        %v675 = vunpack.c.h.b16 %v655
        %v676 = vunpack.c.l.b16 %v656
        %v677 = vunpack.c.h.b16 %v656
        %v678 = vunpack.c.l.b16 %v657
        %v679 = vunpack.c.h.b16 %v657
        %v680 = vunpack.c.l.b16 %v658
        %v681 = vunpack.c.h.b16 %v658
        %v682 = vunpack.c.l.b16 %v659
        %v683 = vunpack.c.h.b16 %v659
        %v684 = vpack.c.b16 %v668, %v668
        %v685 = vpack.c.b16 %v669, %v669
        %v686 = vpack.c.b16 %v670, %v670
        %v687 = vpack.c.b16 %v671, %v671
        %v688 = vpack.c.b16 %v672, %v672
        %v689 = vpack.c.b16 %v673, %v673
        %v690 = vpack.c.b16 %v674, %v674
        %v691 = vpack.c.b16 %v675, %v675
        %v692 = vpack.c.b16 %v676, %v676
        %v693 = vpack.c.b16 %v677, %v677
        %v694 = vpack.c.b16 %v678, %v678
        %v695 = vpack.c.b16 %v679, %v679
        %v696 = vpack.c.b16 %v680, %v680
        %v697 = vpack.c.b16 %v681, %v681
        %v698 = vpack.c.b16 %v682, %v682
        %v699 = vpack.c.b16 %v683, %v683
        %716 = vst [vmem:[%s298] sm:$0xf] %v684
        %717 = vst [vmem:[%s298 + $0x4] sm:$0xf] %v685
        %718 = vst [vmem:[%s298 + $0x8] sm:$0xf] %v686
        %719 = vst [vmem:[%s298 + $0xc] sm:$0xf] %v687
        %720 = vst [vmem:[%s298 + $0x10] sm:$0xf] %v688
        %721 = vst [vmem:[%s298 + $0x14] sm:$0xf] %v689
        %722 = vst [vmem:[%s298 + $0x18] sm:$0xf] %v690
        %723 = vst [vmem:[%s298 + $0x1c] sm:$0xf] %v691
        %724 = vst [vmem:[%s298 + $0x20] sm:$0xf] %v692
        %725 = vst [vmem:[%s298 + $0x24] sm:$0xf] %v693
        %726 = vst [vmem:[%s298 + $0x28] sm:$0xf] %v694
        %727 = vst [vmem:[%s298 + $0x2c] sm:$0xf] %v695
        %728 = vst [vmem:[%s298 + $0x30] sm:$0xf] %v696
        %729 = vst [vmem:[%s298 + $0x34] sm:$0xf] %v697
        %730 = vst [vmem:[%s298 + $0x38] sm:$0xf] %v698
        %731 = vst [vmem:[%s298 + $0x3c] sm:$0xf] %v699
      $region44: #{unet_block_forward.2} parent=35 // pred_fallthru
        _
      %s732 = smul.u32 16, %s20
      %p733 = scmp.lt.s32.totalorder %s732, 63
      %s734 = scalar_select %p733, %s732, 63
      %p735 = scmp.lt.s32.totalorder %s21, 0
      %s736 = scalar_select %p735, %s21, 0
      %s737 = sadd.s32 %s736, %s734
      %s738 = smul.addr %s737, 4
      %s739 = scalar_lea.vmem %s4, %s738
      // Predicated region
      $region45: #{unet_block_forward.2} parent=35 // pred_check
        %p740 = pneg %p162
      $region46: #{unet_block_forward.2} parent=35 // pred_check_branch
        %742 = sbr.rel (%p740) target = $region48
      $region47: #{unet_block_forward.2} parent=35 // pred_region
        %s743 = smul.u32 16, %s20
      $region48: #{unet_block_forward.2} parent=35 // pred_fallthru
        _
    $region36: #{unet_block_forward.2} parent=5 // pred_fallthru
      _
    %p744 = scmp.le.s32.totalorder 2, %s10
    // Predicated region
    $region49: #{unet_block_forward.2} parent=5 // pred_check
      %p745 = pneg %p744
    $region50: #{unet_block_forward.2} parent=5 // pred_check_branch
      %747 = sbr.rel (%p745) target = $region52
    $region51: #{unet_block_forward.2} parent=5 // pred_region
      %s748 = ssub.s32 %s10, 2
      // Predicated region
      $region53: #{unet_block_forward.2} parent=51 // pred_check
        %p749 = pneg %p168
      $region54: #{unet_block_forward.2} parent=51 // pred_check_branch
        %751 = sbr.rel (%p749) target = $region56
      $region55: #{unet_block_forward.2} parent=51 // pred_region
        %s752 = smul.u32 16, %s23
        %p753 = scmp.lt.s32.totalorder %s752, 63
        %s754 = scalar_select %p753, %s752, 63
        %p755 = scmp.lt.s32.totalorder %s24, 0
        %s756 = scalar_select %p755, %s24, 0
        %s757 = sadd.s32 %s756, %s754
        %s758 = smul.addr %s757, 4
        %s759 = scalar_lea.vmem %s4, %s758
      $region56: #{unet_block_forward.2} parent=51 // pred_fallthru
        _
    $region52: #{unet_block_forward.2} parent=5 // pred_fallthru
      _
  $region6: #{unet_block_forward.2} parent=0 // loop_footer
    %s14 = sadd.s32 1, %s10
  $region7: #{unet_block_forward.2} parent=0 // loop_footer_branch
    %9 = sbr.rel target = $region3
  $region8: #{unet_block_forward.2} parent=0 // loop_exit
    _

// kernel: unet_block_forward.3
$region0: #{unet_block_forward.3}
  #allocation0 [shape = 'u32[]', space=smem, size = 0x4, offset = 0x4, fixed_abs, tag = 'smem constant byte address 0x4 - core index']
  #allocation1 [shape = 'u32[144,128]{1,0:T(1,128)}', space=vmem, size = 0x12000, scoped, tag = 'internal scratch']
  #allocation2 [shape = 'f32[128,128]{1,0:T(8,128)}', space=vmem, size = 0x10000, scoped, tag = 'scratch operand']
  %s0 = inlined_call_operand.vmem [shape: bf16[512,288], index: 0, kind: input, shape index: {}]
  %s1 = inlined_call_operand.vmem [shape: bf16[288,128], index: 1, kind: input, shape index: {}]
  %s2 = inlined_call_operand.vmem [shape: f32[1,128], index: 2, kind: input, shape index: {}]
  %s3 = inlined_call_operand.vmem [shape: f32[1,128], index: 3, kind: input, shape index: {}]
  %s4 = inlined_call_operand.hbm [shape: f32[512,128], index: 4, kind: output, shape index: {}]
  %s5 = sld [smem:[#allocation0]]
  $region57: #{unet_block_forward.3} parent=0
    _
  %s7 = ssub.s32 1, %s5
  %s8 = scalar_select 0, %s7, %s5
  $region1: #{unet_block_forward.3} parent=0
    #allocation3 [shape = 'u8[131072]{0}', space=vmem, size = 0x20000, scoped, tag = 'output window, operand 0']
    #allocation4 [shape = 's32[2]{0}', space=sflag, size = 0x8, scoped, tag = 'scoped memory for unet_block_forward.3']
    %9 = vsyncpa [#allocation4], 0
    %s10 = scalar_lea.sflag [#allocation4], 1
    %11 = vsyncpa %s10, 0
    loop: start=0, step=1, limit=6
    $region2: #{unet_block_forward.3} parent=1 // loop_pre_header
      _
    $region3: #{unet_block_forward.3} parent=1 // loop_header
      %s13 = sphi 0, %s17
      %p14 = scmp.ge.s32.totalorder %s13, 6
      %s20 = sphi 0, %s39
      %s21 = sphi 0, %s35
      %s22 = sphi 0, %s31
      %s23 = sphi 0, %s20
      %s24 = sphi 0, %s21
      %s25 = sphi 0, %s22
      %s26 = sphi 0, %s23
      %s27 = sphi 0, %s24
      %s28 = sphi 0, %s25
      %s44 = sphi 0, %s46
      %s47 = sphi 0, %s44
      %s48 = sphi 0, %s47
      %s64 = sphi 0, %s48
      %s72 = sphi 0, %s74
      %s75 = sphi 0, %s72
      %s76 = sphi 0, %s75
      %s92 = sphi 0, %s76
      %s98 = sphi 0, %s100
      %s101 = sphi 0, %s98
      %s102 = sphi 0, %s101
      %s118 = sphi 0, %s102
      %s124 = sphi 0, %s126
      %s127 = sphi 0, %s124
      %s128 = sphi 0, %s127
      %s144 = sphi 0, %s128
      %s152 = sphi 0, %s154
      %s155 = sphi 0, %s152
      %s156 = sphi 0, %s155
      %s172 = sphi 0, %s156
    $region4: #{unet_block_forward.3} parent=1 // loop_header_branch
      %16 = sbr.rel (%p14) target = $region8
    $region5: #{unet_block_forward.3} parent=1 // loop_body
      %s18 = ssub.s32 %s13, 1
      %s19 = ssub.s32 %s13, 2
      %s29 = sadd.s32 1, %s22
      %p30 = scmp.ge.s32.totalorder %s29, 1
      %s31 = scalar_select %p30, 0, %s29
      %s32 = sadd.s32 1, %s21
      %s33 = scalar_select %p30, %s32, %s21
      %p34 = scmp.ge.s32.totalorder %s33, 1
      %s35 = scalar_select %p34, 0, %s33
      %s36 = sadd.s32 1, %s20
      %s37 = scalar_select %p34, %s36, %s20
      %p38 = scmp.ge.s32.totalorder %s37, 4
      %s39 = scalar_select %p38, 0, %s37
      %s40 = ssub.s32 %s20, %s39
      %s41 = ssub.s32 %s22, %s31
      %s42 = sor.u32 %s40, %s41
      %p43 = scmp.eq.s32.totalorder %s42, 0
      %s45 = sadd.s32 %s44, 1
      %s46 = scalar_select %p43, %s44, %s45
      %p49 = pneg %p43
      %p50 = scmp.eq.s32.totalorder %s13, 3
      %p51 = por %p49, %p50
      %p52 = scmp.ne.s32.totalorder %s44, %s47
      %p53 = scmp.eq.s32.totalorder %s13, 0
      %p54 = por %p52, %p53
      %p55 = scmp.ne.s32.totalorder %s44, %s47
      %p56 = scmp.eq.s32.totalorder %s18, 3
      %p57 = por %p55, %p56
      %p58 = scmp.ne.s32.totalorder %s47, %s48
      %p59 = scmp.eq.s32.totalorder %s18, 0
      %p60 = por %p58, %p59
      %p61 = scmp.ne.s32.totalorder %s47, %s48
      %p62 = scmp.eq.s32.totalorder %s19, 3
      %p63 = por %p61, %p62
      %p65 = scmp.ne.s32.totalorder %s48, %s64
      %p66 = scmp.eq.s32.totalorder %s19, 0
      %p67 = por %p65, %p66
      %s68 = ssub.s32 %s22, %s31
      %s69 = ssub.s32 %s21, %s35
      %s70 = sor.u32 %s68, %s69
      %p71 = scmp.eq.s32.totalorder %s70, 0
      %s73 = sadd.s32 %s72, 1
      %s74 = scalar_select %p71, %s72, %s73
      %p77 = pneg %p71
      %p78 = scmp.eq.s32.totalorder %s13, 3
      %p79 = por %p77, %p78
      %p80 = scmp.ne.s32.totalorder %s72, %s75
      %p81 = scmp.eq.s32.totalorder %s13, 0
      %p82 = por %p80, %p81
      %p83 = scmp.ne.s32.totalorder %s72, %s75
      %p84 = scmp.eq.s32.totalorder %s18, 3
      %p85 = por %p83, %p84
      %p86 = scmp.ne.s32.totalorder %s75, %s76
      %p87 = scmp.eq.s32.totalorder %s18, 0
      %p88 = por %p86, %p87
      %p89 = scmp.ne.s32.totalorder %s75, %s76
      %p90 = scmp.eq.s32.totalorder %s19, 3
      %p91 = por %p89, %p90
      %p93 = scmp.ne.s32.totalorder %s76, %s92
      %p94 = scmp.eq.s32.totalorder %s19, 0
      %p95 = por %p93, %p94
      %s96 = ssub.s32 %s21, %s35
      %p97 = scmp.eq.s32.totalorder %s96, 0
      %s99 = sadd.s32 %s98, 1
      %s100 = scalar_select %p97, %s98, %s99
      %p103 = pneg %p97
      %p104 = scmp.eq.s32.totalorder %s13, 3
      %p105 = por %p103, %p104
      %p106 = scmp.ne.s32.totalorder %s98, %s101
      %p107 = scmp.eq.s32.totalorder %s13, 0
      %p108 = por %p106, %p107
      %p109 = scmp.ne.s32.totalorder %s98, %s101
      %p110 = scmp.eq.s32.totalorder %s18, 3
      %p111 = por %p109, %p110
      %p112 = scmp.ne.s32.totalorder %s101, %s102
      %p113 = scmp.eq.s32.totalorder %s18, 0
      %p114 = por %p112, %p113
      %p115 = scmp.ne.s32.totalorder %s101, %s102
      %p116 = scmp.eq.s32.totalorder %s19, 3
      %p117 = por %p115, %p116
      %p119 = scmp.ne.s32.totalorder %s102, %s118
      %p120 = scmp.eq.s32.totalorder %s19, 0
      %p121 = por %p119, %p120
      %s122 = ssub.s32 %s21, %s35
      %p123 = scmp.eq.s32.totalorder %s122, 0
      %s125 = sadd.s32 %s124, 1
      %s126 = scalar_select %p123, %s124, %s125
      %p129 = pneg %p123
      %p130 = scmp.eq.s32.totalorder %s13, 3
      %p131 = por %p129, %p130
      %p132 = scmp.ne.s32.totalorder %s124, %s127
      %p133 = scmp.eq.s32.totalorder %s13, 0
      %p134 = por %p132, %p133
      %p135 = scmp.ne.s32.totalorder %s124, %s127
      %p136 = scmp.eq.s32.totalorder %s18, 3
      %p137 = por %p135, %p136
      %p138 = scmp.ne.s32.totalorder %s127, %s128
      %p139 = scmp.eq.s32.totalorder %s18, 0
      %p140 = por %p138, %p139
      %p141 = scmp.ne.s32.totalorder %s127, %s128
      %p142 = scmp.eq.s32.totalorder %s19, 3
      %p143 = por %p141, %p142
      %p145 = scmp.ne.s32.totalorder %s128, %s144
      %p146 = scmp.eq.s32.totalorder %s19, 0
      %p147 = por %p145, %p146
      %s148 = ssub.s32 %s20, %s39
      %s149 = ssub.s32 %s21, %s35
      %s150 = sor.u32 %s148, %s149
      %p151 = scmp.eq.s32.totalorder %s150, 0
      %s153 = sadd.s32 %s152, 1
      %s154 = scalar_select %p151, %s152, %s153
      %p157 = pneg %p151
      %p158 = scmp.eq.s32.totalorder %s13, 3
      %p159 = por %p157, %p158
      %p160 = scmp.ne.s32.totalorder %s152, %s155
      %p161 = scmp.eq.s32.totalorder %s13, 0
      %p162 = por %p160, %p161
      %p163 = scmp.ne.s32.totalorder %s152, %s155
      %p164 = scmp.eq.s32.totalorder %s18, 3
      %p165 = por %p163, %p164
      %p166 = scmp.ne.s32.totalorder %s155, %s156
      %p167 = scmp.eq.s32.totalorder %s18, 0
      %p168 = por %p166, %p167
      %p169 = scmp.ne.s32.totalorder %s155, %s156
      %p170 = scmp.eq.s32.totalorder %s19, 3
      %p171 = por %p169, %p170
      %p173 = scmp.ne.s32.totalorder %s156, %s172
      %p174 = scmp.eq.s32.totalorder %s19, 0
      %p175 = por %p173, %p174
      %p176 = scmp.le.s32.totalorder 1, %s13
      %p177 = scmp.lt.s32.totalorder %s13, 5
      %p178 = pnand %p176, %p177
      %p179 = pneg %p178
      // Predicated region
      $region9: #{unet_block_forward.3} parent=5 // pred_check
        _
      $region10: #{unet_block_forward.3} parent=5 // pred_check_branch
        %181 = sbr.rel (%p178) target = $region12
      $region11: #{unet_block_forward.3} parent=5 // pred_region
        %s182 = ssub.s32 %s13, 1
        // Predicated region
        $region13: #{unet_block_forward.3} parent=11 // pred_check
          %p183 = pneg %p88
        $region14: #{unet_block_forward.3} parent=11 // pred_check_branch
          %185 = sbr.rel (%p183) target = $region16
        $region15: #{unet_block_forward.3} parent=11 // pred_region
          %s186 = smul.u32 36, %s25
          %p187 = scmp.lt.s32.totalorder %s186, 35
          %s188 = scalar_select %p187, %s186, 35
          %p189 = scmp.lt.s32.totalorder %s24, 0
          %s190 = scalar_select %p189, %s24, 0
          %s191 = sadd.s32 %s190, %s188
          %s192 = smul.addr %s191, 4
          %s193 = scalar_lea.vmem %s1, %s192
          %s194 = smul.u32 36, %s25
        $region16: #{unet_block_forward.3} parent=11 // pred_fallthru
          _
        // Predicated region
        $region17: #{unet_block_forward.3} parent=11 // pred_check
          %p195 = pneg %p114
        $region18: #{unet_block_forward.3} parent=11 // pred_check_branch
          %197 = sbr.rel (%p195) target = $region20
        $region19: #{unet_block_forward.3} parent=11 // pred_region
          %p198 = scmp.lt.s32.totalorder %s24, 0
          %s199 = scalar_select %p198, %s24, 0
          %s200 = scalar_lea.vmem %s2, %s199
        $region20: #{unet_block_forward.3} parent=11 // pred_fallthru
          _
        // Predicated region
        $region21: #{unet_block_forward.3} parent=11 // pred_check
          %p201 = pneg %p140
        $region22: #{unet_block_forward.3} parent=11 // pred_check_branch
          %203 = sbr.rel (%p201) target = $region24
        $region23: #{unet_block_forward.3} parent=11 // pred_region
          %p204 = scmp.lt.s32.totalorder %s24, 0
          %s205 = scalar_select %p204, %s24, 0
          %s206 = scalar_lea.vmem %s3, %s205
        $region24: #{unet_block_forward.3} parent=11 // pred_fallthru
          _
      $region12: #{unet_block_forward.3} parent=5 // pred_fallthru
        _
      %p207 = scmp.lt.s32.totalorder %s13, 4
      // Predicated region
      $region25: #{unet_block_forward.3} parent=5 // pred_check
        %p208 = pneg %p207
      $region26: #{unet_block_forward.3} parent=5 // pred_check_branch
        %210 = sbr.rel (%p208) target = $region28
      $region27: #{unet_block_forward.3} parent=5 // pred_region
        // Predicated region
        $region29: #{unet_block_forward.3} parent=27 // pred_check
          %p211 = pneg %p54
        $region30: #{unet_block_forward.3} parent=27 // pred_check_branch
          %213 = sbr.rel (%p211) target = $region32
        $region31: #{unet_block_forward.3} parent=27 // pred_region
          %s214 = smul.u32 16, %s20
          %s215 = smul.u32 3, %s22
          %p216 = scmp.lt.s32.totalorder %s214, 63
          %s217 = scalar_select %p216, %s214, 63
          %p218 = scmp.lt.s32.totalorder %s215, 2
          %s219 = scalar_select %p218, %s215, 2
          %s220 = smul.addr %s217, 3
          %s221 = sadd.s32 %s219, %s220
          %s222 = smul.addr %s221, 4
          %s223 = scalar_lea.vmem %s0, %s222
          %s224 = smul.u32 16, %s20
          %s225 = smul.u32 3, %s22
        $region32: #{unet_block_forward.3} parent=27 // pred_fallthru
          _
      $region28: #{unet_block_forward.3} parent=5 // pred_fallthru
        _
      %p226 = scmp.le.s32.totalorder 1, %s13
      %p227 = scmp.lt.s32.totalorder %s13, 5
      %p228 = pnand %p226, %p227
      %p229 = pneg %p228
      // Predicated region
      $region33: #{unet_block_forward.3} parent=5 // pred_check
        _
      $region34: #{unet_block_forward.3} parent=5 // pred_check_branch
        %231 = sbr.rel (%p228) target = $region36
      $region35: #{unet_block_forward.3} parent=5 // pred_region
        %s232 = ssub.s32 %s13, 1
        %s233 = smul.u32 16, %s23
        %s234 = smul.u32 3, %s25
        %p235 = scmp.lt.s32.totalorder %s233, 63
        %s236 = scalar_select %p235, %s233, 63
        %p237 = scmp.lt.s32.totalorder %s234, 2
        %s238 = scalar_select %p237, %s234, 2
        %s239 = smul.addr %s236, 3
        %s240 = sadd.s32 %s238, %s239
        %s241 = smul.addr %s240, 4
        %s242 = scalar_lea.vmem %s0, %s241
        %p243 = pneg %p60
        %p244 = pneg %p57
        %s245 = smul.u32 36, %s25
        %p246 = scmp.lt.s32.totalorder %s245, 35
        %s247 = scalar_select %p246, %s245, 35
        %p248 = scmp.lt.s32.totalorder %s24, 0
        %s249 = scalar_select %p248, %s24, 0
        %s250 = sadd.s32 %s249, %s247
        %s251 = smul.addr %s250, 4
        %s252 = scalar_lea.vmem %s1, %s251
        %p253 = pneg %p88
        %p254 = pneg %p85
        %p255 = scmp.lt.s32.totalorder %s24, 0
        %s256 = scalar_select %p255, %s24, 0
        %s257 = scalar_lea.vmem %s2, %s256
        %p258 = pneg %p114
        %p259 = pneg %p111
        %p260 = scmp.lt.s32.totalorder %s24, 0
        %s261 = scalar_select %p260, %s24, 0
        %s262 = scalar_lea.vmem %s3, %s261
        %p263 = pneg %p140
        %p264 = pneg %p137
        %p265 = pneg %p168
        %p266 = pneg %p165
        %s267 = sand.u32 %s155, 1
        %s268 = scalar_lea.sflag [#allocation4], %s267
        %s269 = sand.u32 %s155, 1
        %s270 = smul.addr %s269, 128
        %s271 = scalar_lea.vmem [#allocation3], %s270
        %s272 = smul.u32 16, %s23
        %s273 = smul.u32 3, %s25
        %p274 = scmp.lt.s32.totalorder %s272, 63
        %s275 = scalar_select %p274, %s272, 63
        %p276 = scmp.lt.s32.totalorder %s273, 2
        %s277 = scalar_select %p276, %s273, 2
        %s278 = smul.addr %s275, 3
        %s279 = sadd.s32 %s277, %s278
        %s280 = smul.addr %s279, 4
        %s281 = scalar_lea.vmem %s0, %s280
        %s282 = smul.u32 16, %s23
        %s283 = smul.u32 3, %s25
        %s284 = smul.u32 36, %s25
        %p285 = scmp.lt.s32.totalorder %s284, 35
        %s286 = scalar_select %p285, %s284, 35
        %p287 = scmp.lt.s32.totalorder %s24, 0
        %s288 = scalar_select %p287, %s24, 0
        %s289 = sadd.s32 %s288, %s286
        %s290 = smul.addr %s289, 4
        %s291 = scalar_lea.vmem %s1, %s290
        %s292 = smul.u32 36, %s25
        %p293 = scmp.lt.s32.totalorder %s24, 0
        %s294 = scalar_select %p293, %s24, 0
        %s295 = scalar_lea.vmem %s2, %s294
        %p296 = scmp.lt.s32.totalorder %s24, 0
        %s297 = scalar_select %p296, %s24, 0
        %s298 = scalar_lea.vmem %s3, %s297
        %s299 = smul.u32 16, %s23
        %p301 = scmp.eq.s32.totalorder %s25, 0
        // Predicated region
        $region37: #{unet_block_forward.3} parent=35 // pred_check
          %p302 = pneg %p301
        $region38: #{unet_block_forward.3} parent=35 // pred_check_branch
          %304 = sbr.rel (%p302) target = $region40
        $region39: #{unet_block_forward.3} parent=35 // pred_region
          %305 = vst [vmem:[#allocation2] sm:$0xff] 0.0
          %306 = vst [vmem:[#allocation2 + $0x8] sm:$0xff] 0.0
          %307 = vst [vmem:[#allocation2 + $0x10] sm:$0xff] 0.0
          %308 = vst [vmem:[#allocation2 + $0x18] sm:$0xff] 0.0
          %309 = vst [vmem:[#allocation2 + $0x20] sm:$0xff] 0.0
          %310 = vst [vmem:[#allocation2 + $0x28] sm:$0xff] 0.0
          %311 = vst [vmem:[#allocation2 + $0x30] sm:$0xff] 0.0
          %312 = vst [vmem:[#allocation2 + $0x38] sm:$0xff] 0.0
          %313 = vst [vmem:[#allocation2 + $0x40] sm:$0xff] 0.0
          %314 = vst [vmem:[#allocation2 + $0x48] sm:$0xff] 0.0
          %315 = vst [vmem:[#allocation2 + $0x50] sm:$0xff] 0.0
          %316 = vst [vmem:[#allocation2 + $0x58] sm:$0xff] 0.0
          %317 = vst [vmem:[#allocation2 + $0x60] sm:$0xff] 0.0
          %318 = vst [vmem:[#allocation2 + $0x68] sm:$0xff] 0.0
          %319 = vst [vmem:[#allocation2 + $0x70] sm:$0xff] 0.0
          %320 = vst [vmem:[#allocation2 + $0x78] sm:$0xff] 0.0
        $region40: #{unet_block_forward.3} parent=35 // pred_fallthru
          _
        %v321 = vld [vmem:[#allocation2] sm:$0xff]
        %v322 = vld [vmem:[#allocation2 + $0x8] sm:$0xff]
        %v323 = vld [vmem:[#allocation2 + $0x10] sm:$0xff]
        %v324 = vld [vmem:[#allocation2 + $0x18] sm:$0xff]
        %v325 = vld [vmem:[#allocation2 + $0x20] sm:$0xff]
        %v326 = vld [vmem:[#allocation2 + $0x28] sm:$0xff]
        %v327 = vld [vmem:[#allocation2 + $0x30] sm:$0xff]
        %v328 = vld [vmem:[#allocation2 + $0x38] sm:$0xff]
        %v329 = vld [vmem:[#allocation2 + $0x40] sm:$0xff]
        %v330 = vld [vmem:[#allocation2 + $0x48] sm:$0xff]
        %v331 = vld [vmem:[#allocation2 + $0x50] sm:$0xff]
        %v332 = vld [vmem:[#allocation2 + $0x58] sm:$0xff]
        %v333 = vld [vmem:[#allocation2 + $0x60] sm:$0xff]
        %v334 = vld [vmem:[#allocation2 + $0x68] sm:$0xff]
        %v335 = vld [vmem:[#allocation2 + $0x70] sm:$0xff]
        %v336 = vld [vmem:[#allocation2 + $0x78] sm:$0xff]
        %v337 = vld [vmem:[%s281] sm:$0xff]
        %v338 = vld [vmem:[%s281 + $0x8] sm:$0xf]
        %v339 = vld [vmem:[%s281 + $0xc] sm:$0xff]
        %v340 = vld [vmem:[%s281 + $0x14] sm:$0xf]
        %v341 = vld [vmem:[%s281 + $0x18] sm:$0xff]
        %v342 = vld [vmem:[%s281 + $0x20] sm:$0xf]
        %v343 = vld [vmem:[%s281 + $0x24] sm:$0xff]
        %v344 = vld [vmem:[%s281 + $0x2c] sm:$0xf]
        %v345 = vld [vmem:[%s281 + $0x30] sm:$0xff]
        %v346 = vld [vmem:[%s281 + $0x38] sm:$0xf]
        %v347 = vld [vmem:[%s281 + $0x3c] sm:$0xff]
        %v348 = vld [vmem:[%s281 + $0x44] sm:$0xf]
        %v349 = vld [vmem:[%s281 + $0x48] sm:$0xff]
        %v350 = vld [vmem:[%s281 + $0x50] sm:$0xf]
        %v351 = vld [vmem:[%s281 + $0x54] sm:$0xff]
        %v352 = vld [vmem:[%s281 + $0x5c] sm:$0xf]
        %v353 = vld [vmem:[%s281 + $0x60] sm:$0xff]
        %v354 = vld [vmem:[%s281 + $0x68] sm:$0xf]
        %v355 = vld [vmem:[%s281 + $0x6c] sm:$0xff]
        %v356 = vld [vmem:[%s281 + $0x74] sm:$0xf]
        %v357 = vld [vmem:[%s281 + $0x78] sm:$0xff]
        %v358 = vld [vmem:[%s281 + $0x80] sm:$0xf]
        %v359 = vld [vmem:[%s281 + $0x84] sm:$0xff]
        %v360 = vld [vmem:[%s281 + $0x8c] sm:$0xf]
        %v361 = vld [vmem:[%s281 + $0x90] sm:$0xff]
        %v362 = vld [vmem:[%s281 + $0x98] sm:$0xf]
        %v363 = vld [vmem:[%s281 + $0x9c] sm:$0xff]
        %v364 = vld [vmem:[%s281 + $0xa4] sm:$0xf]
        %v365 = vld [vmem:[%s281 + $0xa8] sm:$0xff]
        %v366 = vld [vmem:[%s281 + $0xb0] sm:$0xf]
        %v367 = vld [vmem:[%s281 + $0xb4] sm:$0xff]
        %v368 = vld [vmem:[%s281 + $0xbc] sm:$0xf]
        %v369 = vld [vmem:[%s291] sm:$0xf]
        %v370 = vld [vmem:[%s291 + $0x4] sm:$0xf]
        %v371 = vld [vmem:[%s291 + $0x8] sm:$0xf]
        %v372 = vld [vmem:[%s291 + $0xc] sm:$0xf]
        %v373 = vld [vmem:[%s291 + $0x10] sm:$0xf]
        %v374 = vld [vmem:[%s291 + $0x14] sm:$0xf]
        %v375 = vld [vmem:[%s291 + $0x18] sm:$0xf]
        %v376 = vld [vmem:[%s291 + $0x1c] sm:$0xf]
        %v377 = vld [vmem:[%s291 + $0x20] sm:$0xf]
        %v378 = vld [vmem:[%s291 + $0x24] sm:$0xf]
        %v379 = vld [vmem:[%s291 + $0x28] sm:$0xf]
        %v380 = vld [vmem:[%s291 + $0x2c] sm:$0xf]
        %v381 = vld [vmem:[%s291 + $0x30] sm:$0xf]
        %v382 = vld [vmem:[%s291 + $0x34] sm:$0xf]
        %v383 = vld [vmem:[%s291 + $0x38] sm:$0xf]
        %v384 = vld [vmem:[%s291 + $0x3c] sm:$0xf]
        %v385 = vld [vmem:[%s291 + $0x40] sm:$0xf]
        %v386 = vld [vmem:[%s291 + $0x44] sm:$0xf]
        %v387 = vld [vmem:[%s291 + $0x48] sm:$0xf]
        %v388 = vld [vmem:[%s291 + $0x4c] sm:$0xf]
        %v389 = vld [vmem:[%s291 + $0x50] sm:$0xf]
        %v390 = vld [vmem:[%s291 + $0x54] sm:$0xf]
        %v391 = vld [vmem:[%s291 + $0x58] sm:$0xf]
        %v392 = vld [vmem:[%s291 + $0x5c] sm:$0xf]
        %v393 = vld [vmem:[%s291 + $0x60] sm:$0xf]
        %v394 = vld [vmem:[%s291 + $0x64] sm:$0xf]
        %v395 = vld [vmem:[%s291 + $0x68] sm:$0xf]
        %v396 = vld [vmem:[%s291 + $0x6c] sm:$0xf]
        %v397 = vld [vmem:[%s291 + $0x70] sm:$0xf]
        %v398 = vld [vmem:[%s291 + $0x74] sm:$0xf]
        %v399 = vld [vmem:[%s291 + $0x78] sm:$0xf]
        %v400 = vld [vmem:[%s291 + $0x7c] sm:$0xf]
        %v401 = vld [vmem:[%s291 + $0x80] sm:$0xf]
        %v402 = vld [vmem:[%s291 + $0x84] sm:$0xf]
        %v403 = vld [vmem:[%s291 + $0x88] sm:$0xf]
        %v404 = vld [vmem:[%s291 + $0x8c] sm:$0xf]
        %v437 = vunpack.c.l.b16 %v337
        %v438 = vunpack.c.h.b16 %v337
        %v439 = vunpack.c.l.b16 %v338
        %v440 = vunpack.c.l.b16 %v339
        %v441 = vunpack.c.h.b16 %v339
        %v442 = vunpack.c.l.b16 %v340
        %v443 = vunpack.c.l.b16 %v341
        %v444 = vunpack.c.h.b16 %v341
        %v445 = vunpack.c.l.b16 %v342
        %v446 = vunpack.c.l.b16 %v343
        %v447 = vunpack.c.h.b16 %v343
        %v448 = vunpack.c.l.b16 %v344
        %v449 = vunpack.c.l.b16 %v345
        %v450 = vunpack.c.h.b16 %v345
        %v451 = vunpack.c.l.b16 %v346
        %v452 = vunpack.c.l.b16 %v347
        %v453 = vunpack.c.h.b16 %v347
        %v454 = vunpack.c.l.b16 %v348
        %v455 = vunpack.c.l.b16 %v349
        %v456 = vunpack.c.h.b16 %v349
        %v457 = vunpack.c.l.b16 %v350
        %v458 = vunpack.c.l.b16 %v351
        %v459 = vunpack.c.h.b16 %v351
        %v460 = vunpack.c.l.b16 %v352
        %v461 = vunpack.c.l.b16 %v353
        %v462 = vunpack.c.h.b16 %v353
        %v463 = vunpack.c.l.b16 %v354
        %v464 = vunpack.c.l.b16 %v355
        %v465 = vunpack.c.h.b16 %v355
        %v466 = vunpack.c.l.b16 %v356
        %v467 = vunpack.c.l.b16 %v357
        %v468 = vunpack.c.h.b16 %v357
        %v469 = vunpack.c.l.b16 %v358
        %v470 = vunpack.c.l.b16 %v359
        %v471 = vunpack.c.h.b16 %v359
        %v472 = vunpack.c.l.b16 %v360
        %v473 = vunpack.c.l.b16 %v361
        %v474 = vunpack.c.h.b16 %v361
        %v475 = vunpack.c.l.b16 %v362
        %v476 = vunpack.c.l.b16 %v363
        %v477 = vunpack.c.h.b16 %v363
        %v478 = vunpack.c.l.b16 %v364
        %v479 = vunpack.c.l.b16 %v365
        %v480 = vunpack.c.h.b16 %v365
        %v481 = vunpack.c.l.b16 %v366
        %v482 = vunpack.c.l.b16 %v367
        %v483 = vunpack.c.h.b16 %v367
        %v484 = vunpack.c.l.b16 %v368
        %v485 = vpack.c.b16 %v440, %v437
        %v486 = vpack.c.b16 %v441, %v438
        %v487 = vpack.c.b16 %v442, %v439
        %v488 = vpack.c.b16 %v446, %v443
        %v489 = vpack.c.b16 %v447, %v444
        %v490 = vpack.c.b16 %v448, %v445
        %v491 = vpack.c.b16 %v452, %v449
        %v492 = vpack.c.b16 %v453, %v450
        %v493 = vpack.c.b16 %v454, %v451
        %v494 = vpack.c.b16 %v458, %v455
        %v495 = vpack.c.b16 %v459, %v456
        %v496 = vpack.c.b16 %v460, %v457
        %v497 = vpack.c.b16 %v464, %v461
        %v498 = vpack.c.b16 %v465, %v462
        %v499 = vpack.c.b16 %v466, %v463
        %v500 = vpack.c.b16 %v470, %v467
        %v501 = vpack.c.b16 %v471, %v468
        %v502 = vpack.c.b16 %v472, %v469
        %v503 = vpack.c.b16 %v476, %v473
        %v504 = vpack.c.b16 %v477, %v474
        %v505 = vpack.c.b16 %v478, %v475
        %v506 = vpack.c.b16 %v482, %v479
        %v507 = vpack.c.b16 %v483, %v480
        %v508 = vpack.c.b16 %v484, %v481
        %v561 = vunpack.c.l.b16 %v369
        %v562 = vunpack.c.l.b16 %v370
        %v563 = vunpack.c.l.b16 %v371
        %v564 = vunpack.c.l.b16 %v372
        %v565 = vunpack.c.l.b16 %v373
        %v566 = vunpack.c.l.b16 %v374
        %v567 = vunpack.c.l.b16 %v375
        %v568 = vunpack.c.l.b16 %v376
        %v569 = vunpack.c.l.b16 %v377
        %v570 = vunpack.c.l.b16 %v378
        %v571 = vunpack.c.l.b16 %v379
        %v572 = vunpack.c.l.b16 %v380
        %v573 = vunpack.c.l.b16 %v381
        %v574 = vunpack.c.l.b16 %v382
        %v575 = vunpack.c.l.b16 %v383
        %v576 = vunpack.c.l.b16 %v384
        %v577 = vunpack.c.l.b16 %v385
        %v578 = vunpack.c.l.b16 %v386
        %v579 = vunpack.c.l.b16 %v387
        %v580 = vunpack.c.l.b16 %v388
        %v581 = vunpack.c.l.b16 %v389
        %v582 = vunpack.c.l.b16 %v390
        %v583 = vunpack.c.l.b16 %v391
        %v584 = vunpack.c.l.b16 %v392
        %v585 = vunpack.c.l.b16 %v393
        %v586 = vunpack.c.l.b16 %v394
        %v587 = vunpack.c.l.b16 %v395
        %v588 = vunpack.c.l.b16 %v396
        %v589 = vunpack.c.l.b16 %v397
        %v590 = vunpack.c.l.b16 %v398
        %v591 = vunpack.c.l.b16 %v399
        %v592 = vunpack.c.l.b16 %v400
        %v593 = vunpack.c.l.b16 %v401
        %v594 = vunpack.c.l.b16 %v402
        %v595 = vunpack.c.l.b16 %v403
        %v596 = vunpack.c.l.b16 %v404
        %v597 = vpack.c.b16 %v562, %v561
        %v598 = vpack.c.b16 %v564, %v563
        %v599 = vpack.c.b16 %v566, %v565
        %v600 = vpack.c.b16 %v568, %v567
        %v601 = vpack.c.b16 %v570, %v569
        %v602 = vpack.c.b16 %v572, %v571
        %v603 = vpack.c.b16 %v574, %v573
        %v604 = vpack.c.b16 %v576, %v575
        %v605 = vpack.c.b16 %v578, %v577
        %v606 = vpack.c.b16 %v580, %v579
        %v607 = vpack.c.b16 %v582, %v581
        %v608 = vpack.c.b16 %v584, %v583
        %v609 = vpack.c.b16 %v586, %v585
        %v610 = vpack.c.b16 %v588, %v587
        %v611 = vpack.c.b16 %v590, %v589
        %v612 = vpack.c.b16 %v592, %v591
        %v613 = vpack.c.b16 %v594, %v593
        %v614 = vpack.c.b16 %v596, %v595
        %vm633 = vcmask 261120
        %v635 = vsel %vm633, %v487, 0
        %v638 = vsel %vm633, %v490, 0
        %v641 = vsel %vm633, %v493, 0
        %v644 = vsel %vm633, %v496, 0
        %v647 = vsel %vm633, %v499, 0
        %v650 = vsel %vm633, %v502, 0
        %v653 = vsel %vm633, %v505, 0
        %v656 = vsel %vm633, %v508, 0
        %658 = vmatprep.subr.bf16.mxu0 0
        %659 = vmatpush1.bf16.msra.mxu0 %v597
        %660 = vmatprep.subr.bf16.mxu0 0
        %661 = vmatpush1.bf16.msra.mxu0 %v598
        %662 = vmatprep.subr.bf16.mxu0 0
        %663 = vmatpush1.bf16.msra.mxu0 %v599
        %664 = vmatprep.subr.bf16.mxu0 0
        %665 = vmatpush1.bf16.msra.mxu0 %v600
        %666 = vmatprep.subr.bf16.mxu0 0
        %667 = vmatpush1.bf16.msra.mxu0 %v601
        %668 = vmatprep.subr.bf16.mxu0 0
        %669 = vmatpush1.bf16.msra.mxu0 %v602
        %670 = vmatprep.subr.bf16.mxu0 0
        %671 = vmatpush1.bf16.msra.mxu0 %v603
        %672 = vmatprep.subr.bf16.mxu0 0
        %673 = vmatpush1.bf16.msra.mxu0 %v604
        %674 = vmatprep.subr.bf16.mxu0 0
        %675 = vmatpush1.bf16.msra.mxu0 %v605
        %676 = vmatprep.subr.bf16.mxu0 0
        %677 = vmatpush1.bf16.msra.mxu0 %v606
        %678 = vmatprep.subr.bf16.mxu0 0
        %679 = vmatpush1.bf16.msra.mxu0 %v607
        %680 = vmatprep.subr.bf16.mxu0 0
        %681 = vmatpush1.bf16.msra.mxu0 %v608
        %682 = vmatprep.subr.bf16.mxu0 0
        %683 = vmatpush1.bf16.msra.mxu0 %v609
        %684 = vmatprep.subr.bf16.mxu0 0
        %685 = vmatpush1.bf16.msra.mxu0 %v610
        %686 = vmatprep.subr.bf16.mxu0 0
        %687 = vmatpush1.bf16.msra.mxu0 %v611
        %688 = vmatprep.subr.bf16.mxu0 0
        %689 = vmatpush1.bf16.msra.mxu0 %v612
        %690 = vmatprep.mubr.bf16.mxu0 %v486
        %691 = vmatmul.mubr.bf16.gmra.mrb[0].mxu0 %v485
        %v692 = vpop.f32.mrb[0].mxu0
        %v693 = vadd.f32 0.0, %v692
        %v694 = vpop.f32.mrb[0].mxu0
        %v695 = vpop.f32.mrb[0].mxu0
        %v696 = vadd.f32 0.0, %v695
        %v697 = vpop.f32.mrb[0].mxu0
        %698 = vmatprep.mubr.bf16.mxu0 %v489
        %699 = vmatmul.mubr.bf16.gmra.mrb[0].mxu0 %v488
        %v700 = vpop.f32.mrb[0].mxu0
        %v701 = vadd.f32 0.0, %v700
        %v702 = vpop.f32.mrb[0].mxu0
        %v703 = vpop.f32.mrb[0].mxu0
        %v704 = vadd.f32 0.0, %v703
        %v705 = vpop.f32.mrb[0].mxu0
        %706 = vmatprep.mubr.bf16.mxu0 %v492
        %707 = vmatmul.mubr.bf16.gmra.mrb[0].mxu0 %v491
        %v708 = vpop.f32.mrb[0].mxu0
        %v709 = vadd.f32 0.0, %v708
        %v710 = vpop.f32.mrb[0].mxu0
        %v711 = vpop.f32.mrb[0].mxu0
        %v712 = vadd.f32 0.0, %v711
        %v713 = vpop.f32.mrb[0].mxu0
        %714 = vmatprep.mubr.bf16.mxu0 %v495
        %715 = vmatmul.mubr.bf16.gmra.mrb[0].mxu0 %v494
        %v716 = vpop.f32.mrb[0].mxu0
        %v717 = vadd.f32 0.0, %v716
        %v718 = vpop.f32.mrb[0].mxu0
        %v719 = vpop.f32.mrb[0].mxu0
        %v720 = vadd.f32 0.0, %v719
        %v721 = vpop.f32.mrb[0].mxu0
        %722 = vmatprep.mubr.bf16.mxu0 %v498
        %723 = vmatmul.mubr.bf16.gmra.mrb[0].mxu0 %v497
        %v724 = vpop.f32.mrb[0].mxu0
        %v725 = vadd.f32 0.0, %v724
        %v726 = vpop.f32.mrb[0].mxu0
        %v727 = vpop.f32.mrb[0].mxu0
        %v728 = vadd.f32 0.0, %v727
        %v729 = vpop.f32.mrb[0].mxu0
        %730 = vmatprep.mubr.bf16.mxu0 %v501
        %731 = vmatmul.mubr.bf16.gmra.mrb[0].mxu0 %v500
        %v732 = vpop.f32.mrb[0].mxu0
        %v733 = vadd.f32 0.0, %v732
        %v734 = vpop.f32.mrb[0].mxu0
        %v735 = vpop.f32.mrb[0].mxu0
        %v736 = vadd.f32 0.0, %v735
        %v737 = vpop.f32.mrb[0].mxu0
        %738 = vmatprep.mubr.bf16.mxu0 %v504
        %739 = vmatmul.mubr.bf16.gmra.mrb[0].mxu0 %v503
        %v740 = vpop.f32.mrb[0].mxu0
        %v741 = vadd.f32 0.0, %v740
        %v742 = vpop.f32.mrb[0].mxu0
        %v743 = vpop.f32.mrb[0].mxu0
        %v744 = vadd.f32 0.0, %v743
        %v745 = vpop.f32.mrb[0].mxu0
        %746 = vmatprep.mubr.bf16.mxu0 %v507
        %747 = vmatmul.mubr.bf16.gmra.mrb[0].mxu0 %v506
        %v748 = vpop.f32.mrb[0].mxu0
        %v749 = vadd.f32 0.0, %v748
        %v750 = vpop.f32.mrb[0].mxu0
        %v751 = vpop.f32.mrb[0].mxu0
        %v752 = vadd.f32 0.0, %v751
        %v753 = vpop.f32.mrb[0].mxu0
        %754 = vdwg.mxu0
        %755 = vmatprep.subr.bf16.mxu0 0
        %756 = vmatpush1.bf16.msra.mxu0 %v613
        %757 = vmatprep.subr.bf16.mxu0 0
        %758 = vmatpush1.bf16.msra.mxu0 %v614
        %759 = vmatprep.subr.bf16.mxu0 0
        %760 = vmatpush1.bf16.msra.mxu0 0
        %761 = vmatprep.subr.bf16.mxu0 0
        %762 = vmatpush1.bf16.msra.mxu0 0
        %763 = vmatprep.subr.bf16.mxu0 0
        %764 = vmatpush1.bf16.msra.mxu0 0
        %765 = vmatprep.subr.bf16.mxu0 0
        %766 = vmatpush1.bf16.msra.mxu0 0
        %767 = vmatprep.subr.bf16.mxu0 0
        %768 = vmatpush1.bf16.msra.mxu0 0
        %769 = vmatprep.subr.bf16.mxu0 0
        %770 = vmatpush1.bf16.msra.mxu0 0
        %771 = vmatprep.subr.bf16.mxu0 0
        %772 = vmatpush1.bf16.msra.mxu0 0
        %773 = vmatprep.subr.bf16.mxu0 0
        %774 = vmatpush1.bf16.msra.mxu0 0
        %775 = vmatprep.subr.bf16.mxu0 0
        %776 = vmatpush1.bf16.msra.mxu0 0
        %777 = vmatprep.subr.bf16.mxu0 0
        %778 = vmatpush1.bf16.msra.mxu0 0
        %779 = vmatprep.subr.bf16.mxu0 0
        %780 = vmatpush1.bf16.msra.mxu0 0
        %781 = vmatprep.subr.bf16.mxu0 0
        %782 = vmatpush1.bf16.msra.mxu0 0
        %783 = vmatprep.subr.bf16.mxu0 0
        %784 = vmatpush1.bf16.msra.mxu0 0
        %785 = vmatprep.subr.bf16.mxu0 0
        %786 = vmatpush1.bf16.msra.mxu0 0
        %787 = vmatprep.mubr.bf16.mxu0 0
        %788 = vmatmul.mubr.bf16.gmra.mrb[0].mxu0 %v635
        %v789 = vpop.f32.mrb[0].mxu0
        %v790 = vadd.f32 %v693, %v789
        %v791 = vpop.f32.mrb[0].mxu0
        %v792 = vpop.f32.mrb[0].mxu0
        %v793 = vadd.f32 %v696, %v792
        %v794 = vpop.f32.mrb[0].mxu0
        %795 = vmatprep.mubr.bf16.mxu0 0
        %796 = vmatmul.mubr.bf16.gmra.mrb[0].mxu0 %v638
        %v797 = vpop.f32.mrb[0].mxu0
        %v798 = vadd.f32 %v701, %v797
        %v799 = vpop.f32.mrb[0].mxu0
        %v800 = vpop.f32.mrb[0].mxu0
        %v801 = vadd.f32 %v704, %v800
        %v802 = vpop.f32.mrb[0].mxu0
        %803 = vmatprep.mubr.bf16.mxu0 0
        %804 = vmatmul.mubr.bf16.gmra.mrb[0].mxu0 %v641
        %v805 = vpop.f32.mrb[0].mxu0
        %v806 = vadd.f32 %v709, %v805
        %v807 = vpop.f32.mrb[0].mxu0
        %v808 = vpop.f32.mrb[0].mxu0
        %v809 = vadd.f32 %v712, %v808
        %v810 = vpop.f32.mrb[0].mxu0
        %811 = vmatprep.mubr.bf16.mxu0 0
        %812 = vmatmul.mubr.bf16.gmra.mrb[0].mxu0 %v644
        %v813 = vpop.f32.mrb[0].mxu0
        %v814 = vadd.f32 %v717, %v813
        %v815 = vpop.f32.mrb[0].mxu0
        %v816 = vpop.f32.mrb[0].mxu0
        %v817 = vadd.f32 %v720, %v816
        %v818 = vpop.f32.mrb[0].mxu0
        %819 = vmatprep.mubr.bf16.mxu0 0
        %820 = vmatmul.mubr.bf16.gmra.mrb[0].mxu0 %v647
        %v821 = vpop.f32.mrb[0].mxu0
        %v822 = vadd.f32 %v725, %v821
        %v823 = vpop.f32.mrb[0].mxu0
        %v824 = vpop.f32.mrb[0].mxu0
        %v825 = vadd.f32 %v728, %v824
        %v826 = vpop.f32.mrb[0].mxu0
        %827 = vmatprep.mubr.bf16.mxu0 0
        %828 = vmatmul.mubr.bf16.gmra.mrb[0].mxu0 %v650
        %v829 = vpop.f32.mrb[0].mxu0
        %v830 = vadd.f32 %v733, %v829
        %v831 = vpop.f32.mrb[0].mxu0
        %v832 = vpop.f32.mrb[0].mxu0
        %v833 = vadd.f32 %v736, %v832
        %v834 = vpop.f32.mrb[0].mxu0
        %835 = vmatprep.mubr.bf16.mxu0 0
        %836 = vmatmul.mubr.bf16.gmra.mrb[0].mxu0 %v653
        %v837 = vpop.f32.mrb[0].mxu0
        %v838 = vadd.f32 %v741, %v837
        %v839 = vpop.f32.mrb[0].mxu0
        %v840 = vpop.f32.mrb[0].mxu0
        %v841 = vadd.f32 %v744, %v840
        %v842 = vpop.f32.mrb[0].mxu0
        %843 = vmatprep.mubr.bf16.mxu0 0
        %844 = vmatmul.mubr.bf16.gmra.mrb[0].mxu0 %v656
        %v845 = vpop.f32.mrb[0].mxu0
        %v846 = vadd.f32 %v749, %v845
        %v847 = vpop.f32.mrb[0].mxu0
        %v848 = vpop.f32.mrb[0].mxu0
        %v849 = vadd.f32 %v752, %v848
        %v850 = vpop.f32.mrb[0].mxu0
        %851 = vdwg.mxu0
        %v852 = vadd.f32 %v321, %v790
        %v853 = vadd.f32 %v322, %v793
        %v854 = vadd.f32 %v323, %v798
        %v855 = vadd.f32 %v324, %v801
        %v856 = vadd.f32 %v325, %v806
        %v857 = vadd.f32 %v326, %v809
        %v858 = vadd.f32 %v327, %v814
        %v859 = vadd.f32 %v328, %v817
        %v860 = vadd.f32 %v329, %v822
        %v861 = vadd.f32 %v330, %v825
        %v862 = vadd.f32 %v331, %v830
        %v863 = vadd.f32 %v332, %v833
        %v864 = vadd.f32 %v333, %v838
        %v865 = vadd.f32 %v334, %v841
        %v866 = vadd.f32 %v335, %v846
        %v867 = vadd.f32 %v336, %v849
        %868 = vst [vmem:[#allocation2] sm:$0xff] %v852
        %869 = vst [vmem:[#allocation2 + $0x8] sm:$0xff] %v853
        %870 = vst [vmem:[#allocation2 + $0x10] sm:$0xff] %v854
        %871 = vst [vmem:[#allocation2 + $0x18] sm:$0xff] %v855
        %872 = vst [vmem:[#allocation2 + $0x20] sm:$0xff] %v856
        %873 = vst [vmem:[#allocation2 + $0x28] sm:$0xff] %v857
        %874 = vst [vmem:[#allocation2 + $0x30] sm:$0xff] %v858
        %875 = vst [vmem:[#allocation2 + $0x38] sm:$0xff] %v859
        %876 = vst [vmem:[#allocation2 + $0x40] sm:$0xff] %v860
        %877 = vst [vmem:[#allocation2 + $0x48] sm:$0xff] %v861
        %878 = vst [vmem:[#allocation2 + $0x50] sm:$0xff] %v862
        %879 = vst [vmem:[#allocation2 + $0x58] sm:$0xff] %v863
        %880 = vst [vmem:[#allocation2 + $0x60] sm:$0xff] %v864
        %881 = vst [vmem:[#allocation2 + $0x68] sm:$0xff] %v865
        %882 = vst [vmem:[#allocation2 + $0x70] sm:$0xff] %v866
        %883 = vst [vmem:[#allocation2 + $0x78] sm:$0xff] %v867
        // Predicated region
        $region41: #{unet_block_forward.3} parent=35 // pred_check
          %p884 = pneg %p301
        $region42: #{unet_block_forward.3} parent=35 // pred_check_branch
          %886 = sbr.rel (%p884) target = $region44
        $region43: #{unet_block_forward.3} parent=35 // pred_region
          %v887 = vld [vmem:[#allocation2] sm:$0xff]
          %v888 = vld [vmem:[#allocation2 + $0x8] sm:$0xff]
          %v889 = vld [vmem:[#allocation2 + $0x10] sm:$0xff]
          %v890 = vld [vmem:[#allocation2 + $0x18] sm:$0xff]
          %v891 = vld [vmem:[#allocation2 + $0x20] sm:$0xff]
          %v892 = vld [vmem:[#allocation2 + $0x28] sm:$0xff]
          %v893 = vld [vmem:[#allocation2 + $0x30] sm:$0xff]
          %v894 = vld [vmem:[#allocation2 + $0x38] sm:$0xff]
          %v895 = vld [vmem:[#allocation2 + $0x40] sm:$0xff]
          %v896 = vld [vmem:[#allocation2 + $0x48] sm:$0xff]
          %v897 = vld [vmem:[#allocation2 + $0x50] sm:$0xff]
          %v898 = vld [vmem:[#allocation2 + $0x58] sm:$0xff]
          %v899 = vld [vmem:[#allocation2 + $0x60] sm:$0xff]
          %v900 = vld [vmem:[#allocation2 + $0x68] sm:$0xff]
          %v901 = vld [vmem:[#allocation2 + $0x70] sm:$0xff]
          %v902 = vld [vmem:[#allocation2 + $0x78] sm:$0xff]
          %v903 = vld [vmem:[%s295] sm:$0x1]
          %v905 = vlaneseq
          %v906 = vshrl.u32 %v905, 7
          %v907 = vsub.s32 0, %v906
          %v908 = vrot.slane %v903, %v907
          %v910 = vmul.f32 %v887, %v908
          %v911 = vmul.f32 %v888, %v908
          %v912 = vmul.f32 %v889, %v908
          %v913 = vmul.f32 %v890, %v908
          %v914 = vmul.f32 %v891, %v908
          %v915 = vmul.f32 %v892, %v908
          %v916 = vmul.f32 %v893, %v908
          %v917 = vmul.f32 %v894, %v908
          %v918 = vmul.f32 %v895, %v908
          %v919 = vmul.f32 %v896, %v908
          %v920 = vmul.f32 %v897, %v908
          %v921 = vmul.f32 %v898, %v908
          %v922 = vmul.f32 %v899, %v908
          %v923 = vmul.f32 %v900, %v908
          %v924 = vmul.f32 %v901, %v908
          %v925 = vmul.f32 %v902, %v908
          %v926 = vld [vmem:[%s298] sm:$0x1]
          %v928 = vlaneseq
          %v929 = vshrl.u32 %v928, 7
          %v930 = vsub.s32 0, %v929
          %v931 = vrot.slane %v926, %v930
          %v933 = vadd.f32 %v910, %v931
          %v934 = vadd.f32 %v911, %v931
          %v935 = vadd.f32 %v912, %v931
          %v936 = vadd.f32 %v913, %v931
          %v937 = vadd.f32 %v914, %v931
          %v938 = vadd.f32 %v915, %v931
          %v939 = vadd.f32 %v916, %v931
          %v940 = vadd.f32 %v917, %v931
          %v941 = vadd.f32 %v918, %v931
          %v942 = vadd.f32 %v919, %v931
          %v943 = vadd.f32 %v920, %v931
          %v944 = vadd.f32 %v921, %v931
          %v945 = vadd.f32 %v922, %v931
          %v946 = vadd.f32 %v923, %v931
          %v947 = vadd.f32 %v924, %v931
          %v948 = vadd.f32 %v925, %v931
          %v949 = vmax.f32 %v933, 0.0
          %v950 = vmax.f32 %v934, 0.0
          %v951 = vmax.f32 %v935, 0.0
          %v952 = vmax.f32 %v936, 0.0
          %v953 = vmax.f32 %v937, 0.0
          %v954 = vmax.f32 %v938, 0.0
          %v955 = vmax.f32 %v939, 0.0
          %v956 = vmax.f32 %v940, 0.0
          %v957 = vmax.f32 %v941, 0.0
          %v958 = vmax.f32 %v942, 0.0
          %v959 = vmax.f32 %v943, 0.0
          %v960 = vmax.f32 %v944, 0.0
          %v961 = vmax.f32 %v945, 0.0
          %v962 = vmax.f32 %v946, 0.0
          %v963 = vmax.f32 %v947, 0.0
          %v964 = vmax.f32 %v948, 0.0
          %965 = vst [vmem:[%s271] sm:$0xff] %v949
          %966 = vst [vmem:[%s271 + $0x8] sm:$0xff] %v950
          %967 = vst [vmem:[%s271 + $0x10] sm:$0xff] %v951
          %968 = vst [vmem:[%s271 + $0x18] sm:$0xff] %v952
          %969 = vst [vmem:[%s271 + $0x20] sm:$0xff] %v953
          %970 = vst [vmem:[%s271 + $0x28] sm:$0xff] %v954
          %971 = vst [vmem:[%s271 + $0x30] sm:$0xff] %v955
          %972 = vst [vmem:[%s271 + $0x38] sm:$0xff] %v956
          %973 = vst [vmem:[%s271 + $0x40] sm:$0xff] %v957
          %974 = vst [vmem:[%s271 + $0x48] sm:$0xff] %v958
          %975 = vst [vmem:[%s271 + $0x50] sm:$0xff] %v959
          %976 = vst [vmem:[%s271 + $0x58] sm:$0xff] %v960
          %977 = vst [vmem:[%s271 + $0x60] sm:$0xff] %v961
          %978 = vst [vmem:[%s271 + $0x68] sm:$0xff] %v962
          %979 = vst [vmem:[%s271 + $0x70] sm:$0xff] %v963
          %980 = vst [vmem:[%s271 + $0x78] sm:$0xff] %v964
        $region44: #{unet_block_forward.3} parent=35 // pred_fallthru
          _
        %s981 = sand.u32 %s155, 1
        %s982 = scalar_lea.sflag [#allocation4], %s981
        %s983 = sand.u32 %s155, 1
        %s984 = smul.addr %s983, 128
        %s985 = scalar_lea.vmem [#allocation3], %s984
        // Predicated region
        $region45: #{unet_block_forward.3} parent=35 // pred_check
          %p986 = pneg %p165
        $region46: #{unet_block_forward.3} parent=35 // pred_check_branch
          %988 = sbr.rel (%p986) target = $region48
        $region47: #{unet_block_forward.3} parent=35 // pred_region
          %s989 = smul.u32 16, %s23
          %s991 = ssub.s32 2048, 2048
          %992 = vsyncadd %s982, %s991
          %s993 = sadd.s32 %s24, %s989
          %s994 = smul.addr %s993, 128
          %s995 = scalar_lea.hbm %s4, %s994
          %s996 = sshll.u32 %s985, 4
          %s997 = int_to_ptr.vmem [resolvable:$true] %s996
          %1002 = dma.vmem_to_hbm [thread:$0]  %s997, 2048, %s995, %s982, 128, 128, 8
        $region48: #{unet_block_forward.3} parent=35 // pred_fallthru
          _
      $region36: #{unet_block_forward.3} parent=5 // pred_fallthru
        _
      %p1003 = scmp.le.s32.totalorder 2, %s13
      // Predicated region
      $region49: #{unet_block_forward.3} parent=5 // pred_check
        %p1004 = pneg %p1003
      $region50: #{unet_block_forward.3} parent=5 // pred_check_branch
        %1006 = sbr.rel (%p1004) target = $region52
      $region51: #{unet_block_forward.3} parent=5 // pred_region
        %s1007 = ssub.s32 %s13, 2
        // Predicated region
        $region53: #{unet_block_forward.3} parent=51 // pred_check
          %p1008 = pneg %p171
        $region54: #{unet_block_forward.3} parent=51 // pred_check_branch
          %1010 = sbr.rel (%p1008) target = $region56
        $region55: #{unet_block_forward.3} parent=51 // pred_region
          %s1011 = sand.u32 %s156, 1
          %s1012 = scalar_lea.sflag [#allocation4], %s1011
          %s1013 = sand.u32 %s156, 1
          %s1014 = smul.addr %s1013, 128
          %s1015 = scalar_lea.vmem [#allocation3], %s1014
          %1016 = dma.done %s1012, 2048
        $region56: #{unet_block_forward.3} parent=51 // pred_fallthru
          _
      $region52: #{unet_block_forward.3} parent=5 // pred_fallthru
        _
    $region6: #{unet_block_forward.3} parent=1 // loop_footer
      %s17 = sadd.s32 1, %s13
    $region7: #{unet_block_forward.3} parent=1 // loop_footer_branch
      %12 = sbr.rel target = $region3
    $region8: #{unet_block_forward.3} parent=1 // loop_exit
      _
    %1017 = vsyncpa [#allocation4], 1
    %s1018 = scalar_lea.sflag [#allocation4], 1
    %1019 = vsyncpa %s1018, 1

</llo_original>
